<compile_context>
chip_gen: v6e
topology: v6e:2x2x1
jax: 0.10.0
libtpu: 0.0.40
codegen_flags: <defaults>
</compile_context>

<pallas_src>
import math

import jax
import jax.numpy as jnp
from jax.experimental import pallas as pl
from jax.experimental.pallas import tpu as pltpu


def bow_embedding_kernel(onehot_ref, w_ref, out_ref):
    # onehot_ref: (TB, TV)       one_hot tile, V on the lane axis
    # w_ref:      (TV, E)        weight tile, E on the lane axis
    # out_ref:    (TB, TV, E)
    # Trailing-axis broadcast is done in-kernel; the small lane->sublane
    # relayout of the (TB, TV) tile rides the XLU slot, which has full slack
    # because the kernel is bound by the output vst / HBM-write stream.
    oh = onehot_ref[...]
    w = w_ref[...]
    out_ref[...] = (oh[:, :, None] * w[None, :, :]).astype(out_ref.dtype)


def _round_up(x: int, m: int) -> int:
    return (x + m - 1) // m * m


def _vmem_capacity_bytes() -> int:
    try:
        return int(pltpu.get_tpu_info().vmem_capacity_bytes)
    except Exception:
        return 64 << 20  # conservative fallback (v7x per-core VMEM)


def _tile_vmem_bytes(tb: int, tv: int, e_pad: int, out_itemsize: int) -> int:
    """Double-buffered VMEM working set for one grid step."""
    w_tile = 2 * _round_up(tv, 8) * e_pad * 4                    # weight tile
    oh_tile = 2 * _round_up(tb, 8) * _round_up(tv, 128) * 4      # one_hot tile
    out_tile = 2 * tb * _round_up(tv, 8) * e_pad * out_itemsize  # output tile
    return w_tile + oh_tile + out_tile


def _choose_tiles(B: int, V: int, E: int, budget: int, out_itemsize: int):
    """Largest (tb, tv) whose double-buffered working set fits `budget`.

    Constraints: tv == V or tv % 128 == 0 (one_hot lane dim / weight & output
    sublane dim), tb == B or tb % 8 == 0 (one_hot sublane dim).
    """
    e_pad = _round_up(E, 128)
    tv_cands = [V] if V <= 2048 else [2048, 1024, 512, 256, 128]
    tb_cands = [B] if B <= 512 else [512, 256, 128, 64, 32, 16, 8]
    best = None
    for tv in tv_cands:
        for tb in tb_cands:
            if _tile_vmem_bytes(tb, tv, e_pad, out_itemsize) <= budget:
                score = tb * min(tv, V)  # per-step output tile size
                if best is None or score > best[0]:
                    best = (score, tb, tv)
    if best is None:
        return (B if B <= 8 else 8), (V if V <= 128 else 128)
    return best[1], best[2]


def bow_embedding(one_hot: jax.Array, weight: jax.Array, *,
                  tb: int | None = None, tv: int | None = None,
                  out_dtype=None,
                  vmem_budget_bytes: int | None = None) -> jax.Array:
    """one_hot: (B, V) f32, weight: (V, E) f32 -> (B, V, E) out_dtype (default f32)."""
    B, V = one_hot.shape
    V_w, E = weight.shape
    assert V == V_w

    out_dtype = weight.dtype if out_dtype is None else jnp.dtype(out_dtype)
    out_itemsize = jnp.dtype(out_dtype).itemsize

    cap = _vmem_capacity_bytes()
    if vmem_budget_bytes is None:
        # ~42 MiB on v5e/v6e (128 MiB VMEM), ~21 MiB per core on v7x (64 MiB VMEM).
        vmem_budget_bytes = min(cap // 3, 48 << 20)

    # Pad E to a multiple of 128 so output stores are unmasked, lane-dense vst.
    e_pad = _round_up(E, 128)
    if e_pad != E:
        weight = jnp.pad(weight, ((0, 0), (0, e_pad - E)))

    auto_tb, auto_tv = _choose_tiles(B, V, E, vmem_budget_bytes, out_itemsize)
    tb = auto_tb if tb is None else tb
    tv = auto_tv if tv is None else tv
    assert tv == V or tv % 128 == 0, "vocab tile must be full V or a multiple of 128"
    assert tb == B or tb % 8 == 0, "batch tile must be full B or a multiple of 8"

    working_set = _tile_vmem_bytes(tb, tv, e_pad, out_itemsize)
    vmem_limit = int(min(cap * 7 // 8, max(working_set + (8 << 20), 16 << 20)))

    # V tiles outer, batch tiles inner: weight block index is constant across
    # the inner axis, so the (tv, e_pad) weight tile is not re-DMA'd per batch tile.
    grid = (pl.cdiv(V, tv), pl.cdiv(B, tb))

    out = pl.pallas_call(
        bow_embedding_kernel,
        out_shape=jax.ShapeDtypeStruct((B, V, e_pad), out_dtype),
        grid_spec=pltpu.PrefetchScalarGridSpec(
            num_scalar_prefetch=0,
            grid=grid,
            in_specs=[
                # one_hot stays 2-D: V on lanes in HBM, no padded relayout.
                pl.BlockSpec((tb, tv), lambda vi, bi: (bi, vi)),
                # Weight tiled over V only; full (padded) E on the lane axis.
                pl.BlockSpec((tv, e_pad), lambda vi, bi: (vi, 0)),
            ],
            out_specs=pl.BlockSpec((tb, tv, e_pad), lambda vi, bi: (bi, vi, 0)),
        ),
        compiler_params=pltpu.CompilerParams(
            dimension_semantics=("parallel", "parallel"),
            vmem_limit_bytes=vmem_limit,
        ),
        cost_estimate=pl.CostEstimate(
            flops=B * V * e_pad,
            transcendentals=0,
            bytes_accessed=(4 * B * V                      # one_hot read
                            + 4 * V * e_pad                # weight read (once per core)
                            + out_itemsize * B * V * e_pad),  # output write
        ),
    )(one_hot, weight)

    if e_pad != E:
        out = out[..., :E]
    return out


def init_weight(key, voc_size: int, e_size: int) -> jax.Array:
    # nn.init.kaiming_normal_ on a (voc_size, e_size) 2D tensor:
    #   fan_in = e_size, gain = sqrt(2) -> std = sqrt(2 / e_size)
    std = math.sqrt(2.0 / e_size)
    return std * jax.random.normal(key, (voc_size, e_size), dtype=jnp.float32)


if __name__ == "__main__":
    # Small but tiling-friendly shapes: E=128 -> lane-dense unmasked stores,
    # V=256 so the forced multi-block test exercises the V-outer grid axis.
    B, V, E = 16, 256, 128

    key = jax.random.PRNGKey(0)
    k_w, k_x = jax.random.split(key)

    weight = init_weight(k_w, V, E)
    # bag-of-words style counts (float), shape (B, V)
    one_hot = jax.random.randint(k_x, (B, V), 0, 3).astype(jnp.float32)

    # reference (plain JAX broadcast, same as torch one_hot.unsqueeze(2) * weight)
    ref = one_hot[:, :, None] * weight[None, :, :]

    # 1) default auto-chosen tiles (single block for this toy size)
    out = jax.block_until_ready(bow_embedding(one_hot, weight))
    assert out.shape == (B, V, E)
    assert jnp.allclose(out, ref, atol=1e-6, rtol=1e-6)

    # 2) forced multi-block tiling: V-outer / B-inner grid, weight reused across batch
    out2 = jax.block_until_ready(bow_embedding(one_hot, weight, tb=8, tv=128))
    assert jnp.allclose(out2, ref, atol=1e-6, rtol=1e-6)

    print("KERNEL_OK")
</pallas_src>

<mosaic_0001>
module attributes {stable_mosaic.version = 11 : i64} {
  func.func @bow_embedding_kernel(%arg0: i32, %arg1: i32, %arg2: memref<16x256xf32, #tpu.memory_space<vmem>>, %arg3: memref<256x128xf32, #tpu.memory_space<vmem>>, %arg4: memref<16x256x128xf32, #tpu.memory_space<vmem>>) attributes {dimension_semantics = [#tpu.dimension_semantics<parallel>, #tpu.dimension_semantics<parallel>], iteration_bounds = array<i64: 1, 1>, scalar_prefetch = 0 : i64, scratch_operands = 0 : i64, tpu.core_type = #tpu.core_type<tc>, window_params = [{transform_indices = @transform_0, window_bounds = array<i64: 16, 256>}, {transform_indices = @transform_1, window_bounds = array<i64: 256, 128>}, {transform_indices = @transform_2, window_bounds = array<i64: 16, 256, 128>}]} {
    %c0 = arith.constant 0 : index
    %c0_0 = arith.constant 0 : index
    %0 = vector.load %arg2[%c0, %c0_0] : memref<16x256xf32, #tpu.memory_space<vmem>>, vector<16x256xf32>
    %c0_1 = arith.constant 0 : index
    %c0_2 = arith.constant 0 : index
    %1 = vector.load %arg3[%c0_1, %c0_2] : memref<256x128xf32, #tpu.memory_space<vmem>>, vector<256x128xf32>
    %2 = vector.shape_cast %0 : vector<16x256xf32> to vector<16x256x1xf32>
    %3 = vector.shape_cast %1 : vector<256x128xf32> to vector<1x256x128xf32>
    %4 = vector.broadcast %2 : vector<16x256x1xf32> to vector<16x256x128xf32>
    %5 = vector.broadcast %3 : vector<1x256x128xf32> to vector<16x256x128xf32>
    %6 = arith.mulf %4, %5 : vector<16x256x128xf32>
    %c0_3 = arith.constant 0 : index
    %c0_4 = arith.constant 0 : index
    %c0_5 = arith.constant 0 : index
    %7 = vector.load %arg4[%c0_3, %c0_4, %c0_5] : memref<16x256x128xf32, #tpu.memory_space<vmem>>, vector<16x256x128xf32>
    tpu.vector_store %arg4[%c0_3, %c0_4, %c0_5], %6 {strides = array<i32>} : memref<16x256x128xf32, #tpu.memory_space<vmem>>, vector<16x256x128xf32>,
    return
  }
  func.func @transform_0(%arg0: i32, %arg1: i32) -> (i32, i32) {
    %c0_i32 = arith.constant 0 : i32
    return %arg1, %arg0 : i32, i32
  }
  func.func @transform_1(%arg0: i32, %arg1: i32) -> (i32, i32) {
    %c0_i32 = arith.constant 0 : i32
    %c0_i32_0 = arith.constant 0 : i32
    return %arg0, %c0_i32 : i32, i32
  }
  func.func @transform_2(%arg0: i32, %arg1: i32) -> (i32, i32, i32) {
    %c0_i32 = arith.constant 0 : i32
    %c0_i32_0 = arith.constant 0 : i32
    return %arg1, %arg0, %c0_i32 : i32, i32, i32
  }
}

</mosaic_0001>

<llo_original>
// kernel: tpu_custom_call.1
$region0: #{tpu_custom_call.1}
  #allocation0 [shape = 'u32[]', space=smem, size = 0x4, offset = 0x4, fixed_abs, tag = 'smem constant byte address 0x4 - core index']
  #allocation1 [shape = 'u32[144,128]{1,0:T(1,128)}', space=vmem, size = 0x12000, scoped, tag = 'internal scratch']
  %s0 = inlined_call_operand.hbm [shape: f32[16,256], index: 0, kind: input, shape index: {}]
  %s1 = inlined_call_operand.hbm [shape: f32[256,128], index: 1, kind: input, shape index: {}]
  %s2 = inlined_call_operand.hbm [shape: f32[16,256,128], index: 2, kind: output, shape index: {}]
  %s3 = sld [smem:[#allocation0]]
  $region26: #{tpu_custom_call.1} parent=0
    _
  %s5 = ssub.s32 1, %s3
  %s6 = scalar_select 0, %s5, %s3
  $region1: #{tpu_custom_call.1} parent=0
    #allocation2 [shape = 'u8[16384]{0}', space=vmem, size = 0x4000, scoped, tag = 'input window, operand 0, single buffered']
    #allocation3 [shape = 's32[1]{0}', space=sflag, size = 0x4, scoped, tag = 'scoped memory for tpu_custom_call.1']
    #allocation4 [shape = 's32[1]{0}', space=sflag, size = 0x4, scoped, tag = 'scoped memory for tpu_custom_call.1']
    #allocation5 [shape = 'u8[131072]{0}', space=vmem, size = 0x20000, scoped, tag = 'input window, operand 1, single buffered']
    #allocation6 [shape = 's32[1]{0}', space=sflag, size = 0x4, scoped, tag = 'scoped memory for tpu_custom_call.1']
    #allocation7 [shape = 'u8[2097152]{0}', space=vmem, size = 0x200000, scoped, tag = 'output window, operand 0, single buffered']
    %7 = vsyncpa [#allocation3], 0
    %8 = vsyncpa [#allocation6], 0
    %9 = vsyncpa [#allocation4], 0
    // Predicated region
    $region2: #{tpu_custom_call.1} parent=1 // pred_check
      _
    $region3: #{tpu_custom_call.1} parent=1 // pred_check_branch
      %11 = sbr.rel (0) target = $region5
    $region4: #{tpu_custom_call.1} parent=1 // pred_region
      %s13 = ssub.s32 512, 512
      %14 = vsyncadd [#allocation3], %s13
      %s15 = sshll.u32 [#allocation2], 4
      %s16 = int_to_ptr.vmem [resolvable:$true] %s15
      %21 = dma.hbm_to_vmem [thread:$0]  %s0, 512, %s16, [#allocation3], 256, 256, 16
    $region5: #{tpu_custom_call.1} parent=1 // pred_fallthru
      _
    // Predicated region
    $region6: #{tpu_custom_call.1} parent=1 // pred_check
      _
    $region7: #{tpu_custom_call.1} parent=1 // pred_check_branch
      %23 = sbr.rel (0) target = $region9
    $region8: #{tpu_custom_call.1} parent=1 // pred_region
      %s25 = ssub.s32 4096, 4096
      %26 = vsyncadd [#allocation6], %s25
      %s27 = sshll.u32 [#allocation5], 4
      %s28 = int_to_ptr.vmem [resolvable:$true] %s27
      %33 = dma.hbm_to_vmem [thread:$0]  %s1, 4096, %s28, [#allocation6], 128, 128, 8
    $region9: #{tpu_custom_call.1} parent=1 // pred_fallthru
      _
    // Predicated region
    $region10: #{tpu_custom_call.1} parent=1 // pred_check
      _
    $region11: #{tpu_custom_call.1} parent=1 // pred_check_branch
      %35 = sbr.rel (0) target = $region13
    $region12: #{tpu_custom_call.1} parent=1 // pred_region
      %36 = dma.done [#allocation3], 512
    $region13: #{tpu_custom_call.1} parent=1 // pred_fallthru
      _
    // Predicated region
    $region14: #{tpu_custom_call.1} parent=1 // pred_check
      _
    $region15: #{tpu_custom_call.1} parent=1 // pred_check_branch
      %38 = sbr.rel (0) target = $region17
    $region16: #{tpu_custom_call.1} parent=1 // pred_region
      %39 = dma.done [#allocation6], 4096
    $region17: #{tpu_custom_call.1} parent=1 // pred_fallthru
      _
    %v40 = vld [vmem:[#allocation2] sm:$0xff]
    %v41 = vld [vmem:[#allocation2 + $0x8] sm:$0xff]
    %v42 = vld [vmem:[#allocation2 + $0x10] sm:$0xff]
    %v43 = vld [vmem:[#allocation2 + $0x18] sm:$0xff]
    %v44 = vld [vmem:[#allocation5] sm:$0xff]
    %v45 = vld [vmem:[#allocation5 + $0x8] sm:$0xff]
    %v46 = vld [vmem:[#allocation5 + $0x10] sm:$0xff]
    %v47 = vld [vmem:[#allocation5 + $0x18] sm:$0xff]
    %v48 = vld [vmem:[#allocation5 + $0x20] sm:$0xff]
    %v49 = vld [vmem:[#allocation5 + $0x28] sm:$0xff]
    %v50 = vld [vmem:[#allocation5 + $0x30] sm:$0xff]
    %v51 = vld [vmem:[#allocation5 + $0x38] sm:$0xff]
    %v52 = vld [vmem:[#allocation5 + $0x40] sm:$0xff]
    %v53 = vld [vmem:[#allocation5 + $0x48] sm:$0xff]
    %v54 = vld [vmem:[#allocation5 + $0x50] sm:$0xff]
    %v55 = vld [vmem:[#allocation5 + $0x58] sm:$0xff]
    %v56 = vld [vmem:[#allocation5 + $0x60] sm:$0xff]
    %v57 = vld [vmem:[#allocation5 + $0x68] sm:$0xff]
    %v58 = vld [vmem:[#allocation5 + $0x70] sm:$0xff]
    %v59 = vld [vmem:[#allocation5 + $0x78] sm:$0xff]
    %v60 = vld [vmem:[#allocation5 + $0x80] sm:$0xff]
    %v61 = vld [vmem:[#allocation5 + $0x88] sm:$0xff]
    %v62 = vld [vmem:[#allocation5 + $0x90] sm:$0xff]
    %v63 = vld [vmem:[#allocation5 + $0x98] sm:$0xff]
    %v64 = vld [vmem:[#allocation5 + $0xa0] sm:$0xff]
    %v65 = vld [vmem:[#allocation5 + $0xa8] sm:$0xff]
    %v66 = vld [vmem:[#allocation5 + $0xb0] sm:$0xff]
    %v67 = vld [vmem:[#allocation5 + $0xb8] sm:$0xff]
    %v68 = vld [vmem:[#allocation5 + $0xc0] sm:$0xff]
    %v69 = vld [vmem:[#allocation5 + $0xc8] sm:$0xff]
    %v70 = vld [vmem:[#allocation5 + $0xd0] sm:$0xff]
    %v71 = vld [vmem:[#allocation5 + $0xd8] sm:$0xff]
    %v72 = vld [vmem:[#allocation5 + $0xe0] sm:$0xff]
    %v73 = vld [vmem:[#allocation5 + $0xe8] sm:$0xff]
    %v74 = vld [vmem:[#allocation5 + $0xf0] sm:$0xff]
    %v75 = vld [vmem:[#allocation5 + $0xf8] sm:$0xff]
    %v76 = vlaneseq
    %v77 = vshrl.u32 %v76, 7
    %v78 = vsub.s32 0, %v77
    %v79 = vrot.slane %v40, %v78
    %81 = vbcast.lane.b32.xlu0 %v79, 256
    %v82 = vpop.permute.xlu0 %81
    %s84 = sor.u32 256, 8
    %85 = vbcast.lane.b32.xlu0 %v79, %s84
    %v86 = vpop.permute.xlu0 %85
    %s88 = sor.u32 256, 16
    %89 = vbcast.lane.b32.xlu0 %v79, %s88
    %v90 = vpop.permute.xlu0 %89
    %s92 = sor.u32 256, 24
    %93 = vbcast.lane.b32.xlu0 %v79, %s92
    %v94 = vpop.permute.xlu0 %93
    %s96 = sor.u32 256, 32
    %97 = vbcast.lane.b32.xlu0 %v79, %s96
    %v98 = vpop.permute.xlu0 %97
    %s100 = sor.u32 256, 40
    %101 = vbcast.lane.b32.xlu0 %v79, %s100
    %v102 = vpop.permute.xlu0 %101
    %s104 = sor.u32 256, 48
    %105 = vbcast.lane.b32.xlu0 %v79, %s104
    %v106 = vpop.permute.xlu0 %105
    %s108 = sor.u32 256, 56
    %109 = vbcast.lane.b32.xlu0 %v79, %s108
    %v110 = vpop.permute.xlu0 %109
    %s112 = sor.u32 256, 64
    %113 = vbcast.lane.b32.xlu0 %v79, %s112
    %v114 = vpop.permute.xlu0 %113
    %s116 = sor.u32 256, 72
    %117 = vbcast.lane.b32.xlu0 %v79, %s116
    %v118 = vpop.permute.xlu0 %117
    %s120 = sor.u32 256, 80
    %121 = vbcast.lane.b32.xlu0 %v79, %s120
    %v122 = vpop.permute.xlu0 %121
    %s124 = sor.u32 256, 88
    %125 = vbcast.lane.b32.xlu0 %v79, %s124
    %v126 = vpop.permute.xlu0 %125
    %s128 = sor.u32 256, 96
    %129 = vbcast.lane.b32.xlu0 %v79, %s128
    %v130 = vpop.permute.xlu0 %129
    %s132 = sor.u32 256, 104
    %133 = vbcast.lane.b32.xlu0 %v79, %s132
    %v134 = vpop.permute.xlu0 %133
    %s136 = sor.u32 256, 112
    %137 = vbcast.lane.b32.xlu0 %v79, %s136
    %v138 = vpop.permute.xlu0 %137
    %s140 = sor.u32 256, 120
    %141 = vbcast.lane.b32.xlu0 %v79, %s140
    %v142 = vpop.permute.xlu0 %141
    %v143 = vlaneseq
    %v144 = vshrl.u32 %v143, 7
    %v145 = vsub.s32 0, %v144
    %v146 = vrot.slane %v41, %v145
    %148 = vbcast.lane.b32.xlu0 %v146, 256
    %v149 = vpop.permute.xlu0 %148
    %s151 = sor.u32 256, 8
    %152 = vbcast.lane.b32.xlu0 %v146, %s151
    %v153 = vpop.permute.xlu0 %152
    %s155 = sor.u32 256, 16
    %156 = vbcast.lane.b32.xlu0 %v146, %s155
    %v157 = vpop.permute.xlu0 %156
    %s159 = sor.u32 256, 24
    %160 = vbcast.lane.b32.xlu0 %v146, %s159
    %v161 = vpop.permute.xlu0 %160
    %s163 = sor.u32 256, 32
    %164 = vbcast.lane.b32.xlu0 %v146, %s163
    %v165 = vpop.permute.xlu0 %164
    %s167 = sor.u32 256, 40
    %168 = vbcast.lane.b32.xlu0 %v146, %s167
    %v169 = vpop.permute.xlu0 %168
    %s171 = sor.u32 256, 48
    %172 = vbcast.lane.b32.xlu0 %v146, %s171
    %v173 = vpop.permute.xlu0 %172
    %s175 = sor.u32 256, 56
    %176 = vbcast.lane.b32.xlu0 %v146, %s175
    %v177 = vpop.permute.xlu0 %176
    %s179 = sor.u32 256, 64
    %180 = vbcast.lane.b32.xlu0 %v146, %s179
    %v181 = vpop.permute.xlu0 %180
    %s183 = sor.u32 256, 72
    %184 = vbcast.lane.b32.xlu0 %v146, %s183
    %v185 = vpop.permute.xlu0 %184
    %s187 = sor.u32 256, 80
    %188 = vbcast.lane.b32.xlu0 %v146, %s187
    %v189 = vpop.permute.xlu0 %188
    %s191 = sor.u32 256, 88
    %192 = vbcast.lane.b32.xlu0 %v146, %s191
    %v193 = vpop.permute.xlu0 %192
    %s195 = sor.u32 256, 96
    %196 = vbcast.lane.b32.xlu0 %v146, %s195
    %v197 = vpop.permute.xlu0 %196
    %s199 = sor.u32 256, 104
    %200 = vbcast.lane.b32.xlu0 %v146, %s199
    %v201 = vpop.permute.xlu0 %200
    %s203 = sor.u32 256, 112
    %204 = vbcast.lane.b32.xlu0 %v146, %s203
    %v205 = vpop.permute.xlu0 %204
    %s207 = sor.u32 256, 120
    %208 = vbcast.lane.b32.xlu0 %v146, %s207
    %v209 = vpop.permute.xlu0 %208
    %v210 = vlaneseq
    %v211 = vshrl.u32 %v210, 7
    %v212 = vsub.s32 1, %v211
    %v213 = vrot.slane %v40, %v212
    %215 = vbcast.lane.b32.xlu0 %v213, 256
    %v216 = vpop.permute.xlu0 %215
    %s218 = sor.u32 256, 8
    %219 = vbcast.lane.b32.xlu0 %v213, %s218
    %v220 = vpop.permute.xlu0 %219
    %s222 = sor.u32 256, 16
    %223 = vbcast.lane.b32.xlu0 %v213, %s222
    %v224 = vpop.permute.xlu0 %223
    %s226 = sor.u32 256, 24
    %227 = vbcast.lane.b32.xlu0 %v213, %s226
    %v228 = vpop.permute.xlu0 %227
    %s230 = sor.u32 256, 32
    %231 = vbcast.lane.b32.xlu0 %v213, %s230
    %v232 = vpop.permute.xlu0 %231
    %s234 = sor.u32 256, 40
    %235 = vbcast.lane.b32.xlu0 %v213, %s234
    %v236 = vpop.permute.xlu0 %235
    %s238 = sor.u32 256, 48
    %239 = vbcast.lane.b32.xlu0 %v213, %s238
    %v240 = vpop.permute.xlu0 %239
    %s242 = sor.u32 256, 56
    %243 = vbcast.lane.b32.xlu0 %v213, %s242
    %v244 = vpop.permute.xlu0 %243
    %s246 = sor.u32 256, 64
    %247 = vbcast.lane.b32.xlu0 %v213, %s246
    %v248 = vpop.permute.xlu0 %247
    %s250 = sor.u32 256, 72
    %251 = vbcast.lane.b32.xlu0 %v213, %s250
    %v252 = vpop.permute.xlu0 %251
    %s254 = sor.u32 256, 80
    %255 = vbcast.lane.b32.xlu0 %v213, %s254
    %v256 = vpop.permute.xlu0 %255
    %s258 = sor.u32 256, 88
    %259 = vbcast.lane.b32.xlu0 %v213, %s258
    %v260 = vpop.permute.xlu0 %259
    %s262 = sor.u32 256, 96
    %263 = vbcast.lane.b32.xlu0 %v213, %s262
    %v264 = vpop.permute.xlu0 %263
    %s266 = sor.u32 256, 104
    %267 = vbcast.lane.b32.xlu0 %v213, %s266
    %v268 = vpop.permute.xlu0 %267
    %s270 = sor.u32 256, 112
    %271 = vbcast.lane.b32.xlu0 %v213, %s270
    %v272 = vpop.permute.xlu0 %271
    %s274 = sor.u32 256, 120
    %275 = vbcast.lane.b32.xlu0 %v213, %s274
    %v276 = vpop.permute.xlu0 %275
    %v277 = vlaneseq
    %v278 = vshrl.u32 %v277, 7
    %v279 = vsub.s32 1, %v278
    %v280 = vrot.slane %v41, %v279
    %282 = vbcast.lane.b32.xlu0 %v280, 256
    %v283 = vpop.permute.xlu0 %282
    %s285 = sor.u32 256, 8
    %286 = vbcast.lane.b32.xlu0 %v280, %s285
    %v287 = vpop.permute.xlu0 %286
    %s289 = sor.u32 256, 16
    %290 = vbcast.lane.b32.xlu0 %v280, %s289
    %v291 = vpop.permute.xlu0 %290
    %s293 = sor.u32 256, 24
    %294 = vbcast.lane.b32.xlu0 %v280, %s293
    %v295 = vpop.permute.xlu0 %294
    %s297 = sor.u32 256, 32
    %298 = vbcast.lane.b32.xlu0 %v280, %s297
    %v299 = vpop.permute.xlu0 %298
    %s301 = sor.u32 256, 40
    %302 = vbcast.lane.b32.xlu0 %v280, %s301
    %v303 = vpop.permute.xlu0 %302
    %s305 = sor.u32 256, 48
    %306 = vbcast.lane.b32.xlu0 %v280, %s305
    %v307 = vpop.permute.xlu0 %306
    %s309 = sor.u32 256, 56
    %310 = vbcast.lane.b32.xlu0 %v280, %s309
    %v311 = vpop.permute.xlu0 %310
    %s313 = sor.u32 256, 64
    %314 = vbcast.lane.b32.xlu0 %v280, %s313
    %v315 = vpop.permute.xlu0 %314
    %s317 = sor.u32 256, 72
    %318 = vbcast.lane.b32.xlu0 %v280, %s317
    %v319 = vpop.permute.xlu0 %318
    %s321 = sor.u32 256, 80
    %322 = vbcast.lane.b32.xlu0 %v280, %s321
    %v323 = vpop.permute.xlu0 %322
    %s325 = sor.u32 256, 88
    %326 = vbcast.lane.b32.xlu0 %v280, %s325
    %v327 = vpop.permute.xlu0 %326
    %s329 = sor.u32 256, 96
    %330 = vbcast.lane.b32.xlu0 %v280, %s329
    %v331 = vpop.permute.xlu0 %330
    %s333 = sor.u32 256, 104
    %334 = vbcast.lane.b32.xlu0 %v280, %s333
    %v335 = vpop.permute.xlu0 %334
    %s337 = sor.u32 256, 112
    %338 = vbcast.lane.b32.xlu0 %v280, %s337
    %v339 = vpop.permute.xlu0 %338
    %s341 = sor.u32 256, 120
    %342 = vbcast.lane.b32.xlu0 %v280, %s341
    %v343 = vpop.permute.xlu0 %342
    %v344 = vlaneseq
    %v345 = vshrl.u32 %v344, 7
    %v346 = vsub.s32 2, %v345
    %v347 = vrot.slane %v40, %v346
    %349 = vbcast.lane.b32.xlu0 %v347, 256
    %v350 = vpop.permute.xlu0 %349
    %s352 = sor.u32 256, 8
    %353 = vbcast.lane.b32.xlu0 %v347, %s352
    %v354 = vpop.permute.xlu0 %353
    %s356 = sor.u32 256, 16
    %357 = vbcast.lane.b32.xlu0 %v347, %s356
    %v358 = vpop.permute.xlu0 %357
    %s360 = sor.u32 256, 24
    %361 = vbcast.lane.b32.xlu0 %v347, %s360
    %v362 = vpop.permute.xlu0 %361
    %s364 = sor.u32 256, 32
    %365 = vbcast.lane.b32.xlu0 %v347, %s364
    %v366 = vpop.permute.xlu0 %365
    %s368 = sor.u32 256, 40
    %369 = vbcast.lane.b32.xlu0 %v347, %s368
    %v370 = vpop.permute.xlu0 %369
    %s372 = sor.u32 256, 48
    %373 = vbcast.lane.b32.xlu0 %v347, %s372
    %v374 = vpop.permute.xlu0 %373
    %s376 = sor.u32 256, 56
    %377 = vbcast.lane.b32.xlu0 %v347, %s376
    %v378 = vpop.permute.xlu0 %377
    %s380 = sor.u32 256, 64
    %381 = vbcast.lane.b32.xlu0 %v347, %s380
    %v382 = vpop.permute.xlu0 %381
    %s384 = sor.u32 256, 72
    %385 = vbcast.lane.b32.xlu0 %v347, %s384
    %v386 = vpop.permute.xlu0 %385
    %s388 = sor.u32 256, 80
    %389 = vbcast.lane.b32.xlu0 %v347, %s388
    %v390 = vpop.permute.xlu0 %389
    %s392 = sor.u32 256, 88
    %393 = vbcast.lane.b32.xlu0 %v347, %s392
    %v394 = vpop.permute.xlu0 %393
    %s396 = sor.u32 256, 96
    %397 = vbcast.lane.b32.xlu0 %v347, %s396
    %v398 = vpop.permute.xlu0 %397
    %s400 = sor.u32 256, 104
    %401 = vbcast.lane.b32.xlu0 %v347, %s400
    %v402 = vpop.permute.xlu0 %401
    %s404 = sor.u32 256, 112
    %405 = vbcast.lane.b32.xlu0 %v347, %s404
    %v406 = vpop.permute.xlu0 %405
    %s408 = sor.u32 256, 120
    %409 = vbcast.lane.b32.xlu0 %v347, %s408
    %v410 = vpop.permute.xlu0 %409
    %v411 = vlaneseq
    %v412 = vshrl.u32 %v411, 7
    %v413 = vsub.s32 2, %v412
    %v414 = vrot.slane %v41, %v413
    %416 = vbcast.lane.b32.xlu0 %v414, 256
    %v417 = vpop.permute.xlu0 %416
    %s419 = sor.u32 256, 8
    %420 = vbcast.lane.b32.xlu0 %v414, %s419
    %v421 = vpop.permute.xlu0 %420
    %s423 = sor.u32 256, 16
    %424 = vbcast.lane.b32.xlu0 %v414, %s423
    %v425 = vpop.permute.xlu0 %424
    %s427 = sor.u32 256, 24
    %428 = vbcast.lane.b32.xlu0 %v414, %s427
    %v429 = vpop.permute.xlu0 %428
    %s431 = sor.u32 256, 32
    %432 = vbcast.lane.b32.xlu0 %v414, %s431
    %v433 = vpop.permute.xlu0 %432
    %s435 = sor.u32 256, 40
    %436 = vbcast.lane.b32.xlu0 %v414, %s435
    %v437 = vpop.permute.xlu0 %436
    %s439 = sor.u32 256, 48
    %440 = vbcast.lane.b32.xlu0 %v414, %s439
    %v441 = vpop.permute.xlu0 %440
    %s443 = sor.u32 256, 56
    %444 = vbcast.lane.b32.xlu0 %v414, %s443
    %v445 = vpop.permute.xlu0 %444
    %s447 = sor.u32 256, 64
    %448 = vbcast.lane.b32.xlu0 %v414, %s447
    %v449 = vpop.permute.xlu0 %448
    %s451 = sor.u32 256, 72
    %452 = vbcast.lane.b32.xlu0 %v414, %s451
    %v453 = vpop.permute.xlu0 %452
    %s455 = sor.u32 256, 80
    %456 = vbcast.lane.b32.xlu0 %v414, %s455
    %v457 = vpop.permute.xlu0 %456
    %s459 = sor.u32 256, 88
    %460 = vbcast.lane.b32.xlu0 %v414, %s459
    %v461 = vpop.permute.xlu0 %460
    %s463 = sor.u32 256, 96
    %464 = vbcast.lane.b32.xlu0 %v414, %s463
    %v465 = vpop.permute.xlu0 %464
    %s467 = sor.u32 256, 104
    %468 = vbcast.lane.b32.xlu0 %v414, %s467
    %v469 = vpop.permute.xlu0 %468
    %s471 = sor.u32 256, 112
    %472 = vbcast.lane.b32.xlu0 %v414, %s471
    %v473 = vpop.permute.xlu0 %472
    %s475 = sor.u32 256, 120
    %476 = vbcast.lane.b32.xlu0 %v414, %s475
    %v477 = vpop.permute.xlu0 %476
    %v478 = vlaneseq
    %v479 = vshrl.u32 %v478, 7
    %v480 = vsub.s32 3, %v479
    %v481 = vrot.slane %v40, %v480
    %483 = vbcast.lane.b32.xlu0 %v481, 256
    %v484 = vpop.permute.xlu0 %483
    %s486 = sor.u32 256, 8
    %487 = vbcast.lane.b32.xlu0 %v481, %s486
    %v488 = vpop.permute.xlu0 %487
    %s490 = sor.u32 256, 16
    %491 = vbcast.lane.b32.xlu0 %v481, %s490
    %v492 = vpop.permute.xlu0 %491
    %s494 = sor.u32 256, 24
    %495 = vbcast.lane.b32.xlu0 %v481, %s494
    %v496 = vpop.permute.xlu0 %495
    %s498 = sor.u32 256, 32
    %499 = vbcast.lane.b32.xlu0 %v481, %s498
    %v500 = vpop.permute.xlu0 %499
    %s502 = sor.u32 256, 40
    %503 = vbcast.lane.b32.xlu0 %v481, %s502
    %v504 = vpop.permute.xlu0 %503
    %s506 = sor.u32 256, 48
    %507 = vbcast.lane.b32.xlu0 %v481, %s506
    %v508 = vpop.permute.xlu0 %507
    %s510 = sor.u32 256, 56
    %511 = vbcast.lane.b32.xlu0 %v481, %s510
    %v512 = vpop.permute.xlu0 %511
    %s514 = sor.u32 256, 64
    %515 = vbcast.lane.b32.xlu0 %v481, %s514
    %v516 = vpop.permute.xlu0 %515
    %s518 = sor.u32 256, 72
    %519 = vbcast.lane.b32.xlu0 %v481, %s518
    %v520 = vpop.permute.xlu0 %519
    %s522 = sor.u32 256, 80
    %523 = vbcast.lane.b32.xlu0 %v481, %s522
    %v524 = vpop.permute.xlu0 %523
    %s526 = sor.u32 256, 88
    %527 = vbcast.lane.b32.xlu0 %v481, %s526
    %v528 = vpop.permute.xlu0 %527
    %s530 = sor.u32 256, 96
    %531 = vbcast.lane.b32.xlu0 %v481, %s530
    %v532 = vpop.permute.xlu0 %531
    %s534 = sor.u32 256, 104
    %535 = vbcast.lane.b32.xlu0 %v481, %s534
    %v536 = vpop.permute.xlu0 %535
    %s538 = sor.u32 256, 112
    %539 = vbcast.lane.b32.xlu0 %v481, %s538
    %v540 = vpop.permute.xlu0 %539
    %s542 = sor.u32 256, 120
    %543 = vbcast.lane.b32.xlu0 %v481, %s542
    %v544 = vpop.permute.xlu0 %543
    %v545 = vlaneseq
    %v546 = vshrl.u32 %v545, 7
    %v547 = vsub.s32 3, %v546
    %v548 = vrot.slane %v41, %v547
    %550 = vbcast.lane.b32.xlu0 %v548, 256
    %v551 = vpop.permute.xlu0 %550
    %s553 = sor.u32 256, 8
    %554 = vbcast.lane.b32.xlu0 %v548, %s553
    %v555 = vpop.permute.xlu0 %554
    %s557 = sor.u32 256, 16
    %558 = vbcast.lane.b32.xlu0 %v548, %s557
    %v559 = vpop.permute.xlu0 %558
    %s561 = sor.u32 256, 24
    %562 = vbcast.lane.b32.xlu0 %v548, %s561
    %v563 = vpop.permute.xlu0 %562
    %s565 = sor.u32 256, 32
    %566 = vbcast.lane.b32.xlu0 %v548, %s565
    %v567 = vpop.permute.xlu0 %566
    %s569 = sor.u32 256, 40
    %570 = vbcast.lane.b32.xlu0 %v548, %s569
    %v571 = vpop.permute.xlu0 %570
    %s573 = sor.u32 256, 48
    %574 = vbcast.lane.b32.xlu0 %v548, %s573
    %v575 = vpop.permute.xlu0 %574
    %s577 = sor.u32 256, 56
    %578 = vbcast.lane.b32.xlu0 %v548, %s577
    %v579 = vpop.permute.xlu0 %578
    %s581 = sor.u32 256, 64
    %582 = vbcast.lane.b32.xlu0 %v548, %s581
    %v583 = vpop.permute.xlu0 %582
    %s585 = sor.u32 256, 72
    %586 = vbcast.lane.b32.xlu0 %v548, %s585
    %v587 = vpop.permute.xlu0 %586
    %s589 = sor.u32 256, 80
    %590 = vbcast.lane.b32.xlu0 %v548, %s589
    %v591 = vpop.permute.xlu0 %590
    %s593 = sor.u32 256, 88
    %594 = vbcast.lane.b32.xlu0 %v548, %s593
    %v595 = vpop.permute.xlu0 %594
    %s597 = sor.u32 256, 96
    %598 = vbcast.lane.b32.xlu0 %v548, %s597
    %v599 = vpop.permute.xlu0 %598
    %s601 = sor.u32 256, 104
    %602 = vbcast.lane.b32.xlu0 %v548, %s601
    %v603 = vpop.permute.xlu0 %602
    %s605 = sor.u32 256, 112
    %606 = vbcast.lane.b32.xlu0 %v548, %s605
    %v607 = vpop.permute.xlu0 %606
    %s609 = sor.u32 256, 120
    %610 = vbcast.lane.b32.xlu0 %v548, %s609
    %v611 = vpop.permute.xlu0 %610
    %v612 = vlaneseq
    %v613 = vshrl.u32 %v612, 7
    %v614 = vsub.s32 4, %v613
    %v615 = vrot.slane %v40, %v614
    %617 = vbcast.lane.b32.xlu0 %v615, 256
    %v618 = vpop.permute.xlu0 %617
    %s620 = sor.u32 256, 8
    %621 = vbcast.lane.b32.xlu0 %v615, %s620
    %v622 = vpop.permute.xlu0 %621
    %s624 = sor.u32 256, 16
    %625 = vbcast.lane.b32.xlu0 %v615, %s624
    %v626 = vpop.permute.xlu0 %625
    %s628 = sor.u32 256, 24
    %629 = vbcast.lane.b32.xlu0 %v615, %s628
    %v630 = vpop.permute.xlu0 %629
    %s632 = sor.u32 256, 32
    %633 = vbcast.lane.b32.xlu0 %v615, %s632
    %v634 = vpop.permute.xlu0 %633
    %s636 = sor.u32 256, 40
    %637 = vbcast.lane.b32.xlu0 %v615, %s636
    %v638 = vpop.permute.xlu0 %637
    %s640 = sor.u32 256, 48
    %641 = vbcast.lane.b32.xlu0 %v615, %s640
    %v642 = vpop.permute.xlu0 %641
    %s644 = sor.u32 256, 56
    %645 = vbcast.lane.b32.xlu0 %v615, %s644
    %v646 = vpop.permute.xlu0 %645
    %s648 = sor.u32 256, 64
    %649 = vbcast.lane.b32.xlu0 %v615, %s648
    %v650 = vpop.permute.xlu0 %649
    %s652 = sor.u32 256, 72
    %653 = vbcast.lane.b32.xlu0 %v615, %s652
    %v654 = vpop.permute.xlu0 %653
    %s656 = sor.u32 256, 80
    %657 = vbcast.lane.b32.xlu0 %v615, %s656
    %v658 = vpop.permute.xlu0 %657
    %s660 = sor.u32 256, 88
    %661 = vbcast.lane.b32.xlu0 %v615, %s660
    %v662 = vpop.permute.xlu0 %661
    %s664 = sor.u32 256, 96
    %665 = vbcast.lane.b32.xlu0 %v615, %s664
    %v666 = vpop.permute.xlu0 %665
    %s668 = sor.u32 256, 104
    %669 = vbcast.lane.b32.xlu0 %v615, %s668
    %v670 = vpop.permute.xlu0 %669
    %s672 = sor.u32 256, 112
    %673 = vbcast.lane.b32.xlu0 %v615, %s672
    %v674 = vpop.permute.xlu0 %673
    %s676 = sor.u32 256, 120
    %677 = vbcast.lane.b32.xlu0 %v615, %s676
    %v678 = vpop.permute.xlu0 %677
    %v679 = vlaneseq
    %v680 = vshrl.u32 %v679, 7
    %v681 = vsub.s32 4, %v680
    %v682 = vrot.slane %v41, %v681
    %684 = vbcast.lane.b32.xlu0 %v682, 256
    %v685 = vpop.permute.xlu0 %684
    %s687 = sor.u32 256, 8
    %688 = vbcast.lane.b32.xlu0 %v682, %s687
    %v689 = vpop.permute.xlu0 %688
    %s691 = sor.u32 256, 16
    %692 = vbcast.lane.b32.xlu0 %v682, %s691
    %v693 = vpop.permute.xlu0 %692
    %s695 = sor.u32 256, 24
    %696 = vbcast.lane.b32.xlu0 %v682, %s695
    %v697 = vpop.permute.xlu0 %696
    %s699 = sor.u32 256, 32
    %700 = vbcast.lane.b32.xlu0 %v682, %s699
    %v701 = vpop.permute.xlu0 %700
    %s703 = sor.u32 256, 40
    %704 = vbcast.lane.b32.xlu0 %v682, %s703
    %v705 = vpop.permute.xlu0 %704
    %s707 = sor.u32 256, 48
    %708 = vbcast.lane.b32.xlu0 %v682, %s707
    %v709 = vpop.permute.xlu0 %708
    %s711 = sor.u32 256, 56
    %712 = vbcast.lane.b32.xlu0 %v682, %s711
    %v713 = vpop.permute.xlu0 %712
    %s715 = sor.u32 256, 64
    %716 = vbcast.lane.b32.xlu0 %v682, %s715
    %v717 = vpop.permute.xlu0 %716
    %s719 = sor.u32 256, 72
    %720 = vbcast.lane.b32.xlu0 %v682, %s719
    %v721 = vpop.permute.xlu0 %720
    %s723 = sor.u32 256, 80
    %724 = vbcast.lane.b32.xlu0 %v682, %s723
    %v725 = vpop.permute.xlu0 %724
    %s727 = sor.u32 256, 88
    %728 = vbcast.lane.b32.xlu0 %v682, %s727
    %v729 = vpop.permute.xlu0 %728
    %s731 = sor.u32 256, 96
    %732 = vbcast.lane.b32.xlu0 %v682, %s731
    %v733 = vpop.permute.xlu0 %732
    %s735 = sor.u32 256, 104
    %736 = vbcast.lane.b32.xlu0 %v682, %s735
    %v737 = vpop.permute.xlu0 %736
    %s739 = sor.u32 256, 112
    %740 = vbcast.lane.b32.xlu0 %v682, %s739
    %v741 = vpop.permute.xlu0 %740
    %s743 = sor.u32 256, 120
    %744 = vbcast.lane.b32.xlu0 %v682, %s743
    %v745 = vpop.permute.xlu0 %744
    %v746 = vlaneseq
    %v747 = vshrl.u32 %v746, 7
    %v748 = vsub.s32 5, %v747
    %v749 = vrot.slane %v40, %v748
    %751 = vbcast.lane.b32.xlu0 %v749, 256
    %v752 = vpop.permute.xlu0 %751
    %s754 = sor.u32 256, 8
    %755 = vbcast.lane.b32.xlu0 %v749, %s754
    %v756 = vpop.permute.xlu0 %755
    %s758 = sor.u32 256, 16
    %759 = vbcast.lane.b32.xlu0 %v749, %s758
    %v760 = vpop.permute.xlu0 %759
    %s762 = sor.u32 256, 24
    %763 = vbcast.lane.b32.xlu0 %v749, %s762
    %v764 = vpop.permute.xlu0 %763
    %s766 = sor.u32 256, 32
    %767 = vbcast.lane.b32.xlu0 %v749, %s766
    %v768 = vpop.permute.xlu0 %767
    %s770 = sor.u32 256, 40
    %771 = vbcast.lane.b32.xlu0 %v749, %s770
    %v772 = vpop.permute.xlu0 %771
    %s774 = sor.u32 256, 48
    %775 = vbcast.lane.b32.xlu0 %v749, %s774
    %v776 = vpop.permute.xlu0 %775
    %s778 = sor.u32 256, 56
    %779 = vbcast.lane.b32.xlu0 %v749, %s778
    %v780 = vpop.permute.xlu0 %779
    %s782 = sor.u32 256, 64
    %783 = vbcast.lane.b32.xlu0 %v749, %s782
    %v784 = vpop.permute.xlu0 %783
    %s786 = sor.u32 256, 72
    %787 = vbcast.lane.b32.xlu0 %v749, %s786
    %v788 = vpop.permute.xlu0 %787
    %s790 = sor.u32 256, 80
    %791 = vbcast.lane.b32.xlu0 %v749, %s790
    %v792 = vpop.permute.xlu0 %791
    %s794 = sor.u32 256, 88
    %795 = vbcast.lane.b32.xlu0 %v749, %s794
    %v796 = vpop.permute.xlu0 %795
    %s798 = sor.u32 256, 96
    %799 = vbcast.lane.b32.xlu0 %v749, %s798
    %v800 = vpop.permute.xlu0 %799
    %s802 = sor.u32 256, 104
    %803 = vbcast.lane.b32.xlu0 %v749, %s802
    %v804 = vpop.permute.xlu0 %803
    %s806 = sor.u32 256, 112
    %807 = vbcast.lane.b32.xlu0 %v749, %s806
    %v808 = vpop.permute.xlu0 %807
    %s810 = sor.u32 256, 120
    %811 = vbcast.lane.b32.xlu0 %v749, %s810
    %v812 = vpop.permute.xlu0 %811
    %v813 = vlaneseq
    %v814 = vshrl.u32 %v813, 7
    %v815 = vsub.s32 5, %v814
    %v816 = vrot.slane %v41, %v815
    %818 = vbcast.lane.b32.xlu0 %v816, 256
    %v819 = vpop.permute.xlu0 %818
    %s821 = sor.u32 256, 8
    %822 = vbcast.lane.b32.xlu0 %v816, %s821
    %v823 = vpop.permute.xlu0 %822
    %s825 = sor.u32 256, 16
    %826 = vbcast.lane.b32.xlu0 %v816, %s825
    %v827 = vpop.permute.xlu0 %826
    %s829 = sor.u32 256, 24
    %830 = vbcast.lane.b32.xlu0 %v816, %s829
    %v831 = vpop.permute.xlu0 %830
    %s833 = sor.u32 256, 32
    %834 = vbcast.lane.b32.xlu0 %v816, %s833
    %v835 = vpop.permute.xlu0 %834
    %s837 = sor.u32 256, 40
    %838 = vbcast.lane.b32.xlu0 %v816, %s837
    %v839 = vpop.permute.xlu0 %838
    %s841 = sor.u32 256, 48
    %842 = vbcast.lane.b32.xlu0 %v816, %s841
    %v843 = vpop.permute.xlu0 %842
    %s845 = sor.u32 256, 56
    %846 = vbcast.lane.b32.xlu0 %v816, %s845
    %v847 = vpop.permute.xlu0 %846
    %s849 = sor.u32 256, 64
    %850 = vbcast.lane.b32.xlu0 %v816, %s849
    %v851 = vpop.permute.xlu0 %850
    %s853 = sor.u32 256, 72
    %854 = vbcast.lane.b32.xlu0 %v816, %s853
    %v855 = vpop.permute.xlu0 %854
    %s857 = sor.u32 256, 80
    %858 = vbcast.lane.b32.xlu0 %v816, %s857
    %v859 = vpop.permute.xlu0 %858
    %s861 = sor.u32 256, 88
    %862 = vbcast.lane.b32.xlu0 %v816, %s861
    %v863 = vpop.permute.xlu0 %862
    %s865 = sor.u32 256, 96
    %866 = vbcast.lane.b32.xlu0 %v816, %s865
    %v867 = vpop.permute.xlu0 %866
    %s869 = sor.u32 256, 104
    %870 = vbcast.lane.b32.xlu0 %v816, %s869
    %v871 = vpop.permute.xlu0 %870
    %s873 = sor.u32 256, 112
    %874 = vbcast.lane.b32.xlu0 %v816, %s873
    %v875 = vpop.permute.xlu0 %874
    %s877 = sor.u32 256, 120
    %878 = vbcast.lane.b32.xlu0 %v816, %s877
    %v879 = vpop.permute.xlu0 %878
    %v880 = vlaneseq
    %v881 = vshrl.u32 %v880, 7
    %v882 = vsub.s32 6, %v881
    %v883 = vrot.slane %v40, %v882
    %885 = vbcast.lane.b32.xlu0 %v883, 256
    %v886 = vpop.permute.xlu0 %885
    %s888 = sor.u32 256, 8
    %889 = vbcast.lane.b32.xlu0 %v883, %s888
    %v890 = vpop.permute.xlu0 %889
    %s892 = sor.u32 256, 16
    %893 = vbcast.lane.b32.xlu0 %v883, %s892
    %v894 = vpop.permute.xlu0 %893
    %s896 = sor.u32 256, 24
    %897 = vbcast.lane.b32.xlu0 %v883, %s896
    %v898 = vpop.permute.xlu0 %897
    %s900 = sor.u32 256, 32
    %901 = vbcast.lane.b32.xlu0 %v883, %s900
    %v902 = vpop.permute.xlu0 %901
    %s904 = sor.u32 256, 40
    %905 = vbcast.lane.b32.xlu0 %v883, %s904
    %v906 = vpop.permute.xlu0 %905
    %s908 = sor.u32 256, 48
    %909 = vbcast.lane.b32.xlu0 %v883, %s908
    %v910 = vpop.permute.xlu0 %909
    %s912 = sor.u32 256, 56
    %913 = vbcast.lane.b32.xlu0 %v883, %s912
    %v914 = vpop.permute.xlu0 %913
    %s916 = sor.u32 256, 64
    %917 = vbcast.lane.b32.xlu0 %v883, %s916
    %v918 = vpop.permute.xlu0 %917
    %s920 = sor.u32 256, 72
    %921 = vbcast.lane.b32.xlu0 %v883, %s920
    %v922 = vpop.permute.xlu0 %921
    %s924 = sor.u32 256, 80
    %925 = vbcast.lane.b32.xlu0 %v883, %s924
    %v926 = vpop.permute.xlu0 %925
    %s928 = sor.u32 256, 88
    %929 = vbcast.lane.b32.xlu0 %v883, %s928
    %v930 = vpop.permute.xlu0 %929
    %s932 = sor.u32 256, 96
    %933 = vbcast.lane.b32.xlu0 %v883, %s932
    %v934 = vpop.permute.xlu0 %933
    %s936 = sor.u32 256, 104
    %937 = vbcast.lane.b32.xlu0 %v883, %s936
    %v938 = vpop.permute.xlu0 %937
    %s940 = sor.u32 256, 112
    %941 = vbcast.lane.b32.xlu0 %v883, %s940
    %v942 = vpop.permute.xlu0 %941
    %s944 = sor.u32 256, 120
    %945 = vbcast.lane.b32.xlu0 %v883, %s944
    %v946 = vpop.permute.xlu0 %945
    %v947 = vlaneseq
    %v948 = vshrl.u32 %v947, 7
    %v949 = vsub.s32 6, %v948
    %v950 = vrot.slane %v41, %v949
    %952 = vbcast.lane.b32.xlu0 %v950, 256
    %v953 = vpop.permute.xlu0 %952
    %s955 = sor.u32 256, 8
    %956 = vbcast.lane.b32.xlu0 %v950, %s955
    %v957 = vpop.permute.xlu0 %956
    %s959 = sor.u32 256, 16
    %960 = vbcast.lane.b32.xlu0 %v950, %s959
    %v961 = vpop.permute.xlu0 %960
    %s963 = sor.u32 256, 24
    %964 = vbcast.lane.b32.xlu0 %v950, %s963
    %v965 = vpop.permute.xlu0 %964
    %s967 = sor.u32 256, 32
    %968 = vbcast.lane.b32.xlu0 %v950, %s967
    %v969 = vpop.permute.xlu0 %968
    %s971 = sor.u32 256, 40
    %972 = vbcast.lane.b32.xlu0 %v950, %s971
    %v973 = vpop.permute.xlu0 %972
    %s975 = sor.u32 256, 48
    %976 = vbcast.lane.b32.xlu0 %v950, %s975
    %v977 = vpop.permute.xlu0 %976
    %s979 = sor.u32 256, 56
    %980 = vbcast.lane.b32.xlu0 %v950, %s979
    %v981 = vpop.permute.xlu0 %980
    %s983 = sor.u32 256, 64
    %984 = vbcast.lane.b32.xlu0 %v950, %s983
    %v985 = vpop.permute.xlu0 %984
    %s987 = sor.u32 256, 72
    %988 = vbcast.lane.b32.xlu0 %v950, %s987
    %v989 = vpop.permute.xlu0 %988
    %s991 = sor.u32 256, 80
    %992 = vbcast.lane.b32.xlu0 %v950, %s991
    %v993 = vpop.permute.xlu0 %992
    %s995 = sor.u32 256, 88
    %996 = vbcast.lane.b32.xlu0 %v950, %s995
    %v997 = vpop.permute.xlu0 %996
    %s999 = sor.u32 256, 96
    %1000 = vbcast.lane.b32.xlu0 %v950, %s999
    %v1001 = vpop.permute.xlu0 %1000
    %s1003 = sor.u32 256, 104
    %1004 = vbcast.lane.b32.xlu0 %v950, %s1003
    %v1005 = vpop.permute.xlu0 %1004
    %s1007 = sor.u32 256, 112
    %1008 = vbcast.lane.b32.xlu0 %v950, %s1007
    %v1009 = vpop.permute.xlu0 %1008
    %s1011 = sor.u32 256, 120
    %1012 = vbcast.lane.b32.xlu0 %v950, %s1011
    %v1013 = vpop.permute.xlu0 %1012
    %v1014 = vlaneseq
    %v1015 = vshrl.u32 %v1014, 7
    %v1016 = vsub.s32 7, %v1015
    %v1017 = vrot.slane %v40, %v1016
    %1019 = vbcast.lane.b32.xlu0 %v1017, 256
    %v1020 = vpop.permute.xlu0 %1019
    %s1022 = sor.u32 256, 8
    %1023 = vbcast.lane.b32.xlu0 %v1017, %s1022
    %v1024 = vpop.permute.xlu0 %1023
    %s1026 = sor.u32 256, 16
    %1027 = vbcast.lane.b32.xlu0 %v1017, %s1026
    %v1028 = vpop.permute.xlu0 %1027
    %s1030 = sor.u32 256, 24
    %1031 = vbcast.lane.b32.xlu0 %v1017, %s1030
    %v1032 = vpop.permute.xlu0 %1031
    %s1034 = sor.u32 256, 32
    %1035 = vbcast.lane.b32.xlu0 %v1017, %s1034
    %v1036 = vpop.permute.xlu0 %1035
    %s1038 = sor.u32 256, 40
    %1039 = vbcast.lane.b32.xlu0 %v1017, %s1038
    %v1040 = vpop.permute.xlu0 %1039
    %s1042 = sor.u32 256, 48
    %1043 = vbcast.lane.b32.xlu0 %v1017, %s1042
    %v1044 = vpop.permute.xlu0 %1043
    %s1046 = sor.u32 256, 56
    %1047 = vbcast.lane.b32.xlu0 %v1017, %s1046
    %v1048 = vpop.permute.xlu0 %1047
    %s1050 = sor.u32 256, 64
    %1051 = vbcast.lane.b32.xlu0 %v1017, %s1050
    %v1052 = vpop.permute.xlu0 %1051
    %s1054 = sor.u32 256, 72
    %1055 = vbcast.lane.b32.xlu0 %v1017, %s1054
    %v1056 = vpop.permute.xlu0 %1055
    %s1058 = sor.u32 256, 80
    %1059 = vbcast.lane.b32.xlu0 %v1017, %s1058
    %v1060 = vpop.permute.xlu0 %1059
    %s1062 = sor.u32 256, 88
    %1063 = vbcast.lane.b32.xlu0 %v1017, %s1062
    %v1064 = vpop.permute.xlu0 %1063
    %s1066 = sor.u32 256, 96
    %1067 = vbcast.lane.b32.xlu0 %v1017, %s1066
    %v1068 = vpop.permute.xlu0 %1067
    %s1070 = sor.u32 256, 104
    %1071 = vbcast.lane.b32.xlu0 %v1017, %s1070
    %v1072 = vpop.permute.xlu0 %1071
    %s1074 = sor.u32 256, 112
    %1075 = vbcast.lane.b32.xlu0 %v1017, %s1074
    %v1076 = vpop.permute.xlu0 %1075
    %s1078 = sor.u32 256, 120
    %1079 = vbcast.lane.b32.xlu0 %v1017, %s1078
    %v1080 = vpop.permute.xlu0 %1079
    %v1081 = vlaneseq
    %v1082 = vshrl.u32 %v1081, 7
    %v1083 = vsub.s32 7, %v1082
    %v1084 = vrot.slane %v41, %v1083
    %1086 = vbcast.lane.b32.xlu0 %v1084, 256
    %v1087 = vpop.permute.xlu0 %1086
    %s1089 = sor.u32 256, 8
    %1090 = vbcast.lane.b32.xlu0 %v1084, %s1089
    %v1091 = vpop.permute.xlu0 %1090
    %s1093 = sor.u32 256, 16
    %1094 = vbcast.lane.b32.xlu0 %v1084, %s1093
    %v1095 = vpop.permute.xlu0 %1094
    %s1097 = sor.u32 256, 24
    %1098 = vbcast.lane.b32.xlu0 %v1084, %s1097
    %v1099 = vpop.permute.xlu0 %1098
    %s1101 = sor.u32 256, 32
    %1102 = vbcast.lane.b32.xlu0 %v1084, %s1101
    %v1103 = vpop.permute.xlu0 %1102
    %s1105 = sor.u32 256, 40
    %1106 = vbcast.lane.b32.xlu0 %v1084, %s1105
    %v1107 = vpop.permute.xlu0 %1106
    %s1109 = sor.u32 256, 48
    %1110 = vbcast.lane.b32.xlu0 %v1084, %s1109
    %v1111 = vpop.permute.xlu0 %1110
    %s1113 = sor.u32 256, 56
    %1114 = vbcast.lane.b32.xlu0 %v1084, %s1113
    %v1115 = vpop.permute.xlu0 %1114
    %s1117 = sor.u32 256, 64
    %1118 = vbcast.lane.b32.xlu0 %v1084, %s1117
    %v1119 = vpop.permute.xlu0 %1118
    %s1121 = sor.u32 256, 72
    %1122 = vbcast.lane.b32.xlu0 %v1084, %s1121
    %v1123 = vpop.permute.xlu0 %1122
    %s1125 = sor.u32 256, 80
    %1126 = vbcast.lane.b32.xlu0 %v1084, %s1125
    %v1127 = vpop.permute.xlu0 %1126
    %s1129 = sor.u32 256, 88
    %1130 = vbcast.lane.b32.xlu0 %v1084, %s1129
    %v1131 = vpop.permute.xlu0 %1130
    %s1133 = sor.u32 256, 96
    %1134 = vbcast.lane.b32.xlu0 %v1084, %s1133
    %v1135 = vpop.permute.xlu0 %1134
    %s1137 = sor.u32 256, 104
    %1138 = vbcast.lane.b32.xlu0 %v1084, %s1137
    %v1139 = vpop.permute.xlu0 %1138
    %s1141 = sor.u32 256, 112
    %1142 = vbcast.lane.b32.xlu0 %v1084, %s1141
    %v1143 = vpop.permute.xlu0 %1142
    %s1145 = sor.u32 256, 120
    %1146 = vbcast.lane.b32.xlu0 %v1084, %s1145
    %v1147 = vpop.permute.xlu0 %1146
    %v1148 = vlaneseq
    %v1149 = vshrl.u32 %v1148, 7
    %v1150 = vsub.s32 0, %v1149
    %v1151 = vrot.slane %v42, %v1150
    %1153 = vbcast.lane.b32.xlu0 %v1151, 256
    %v1154 = vpop.permute.xlu0 %1153
    %s1156 = sor.u32 256, 8
    %1157 = vbcast.lane.b32.xlu0 %v1151, %s1156
    %v1158 = vpop.permute.xlu0 %1157
    %s1160 = sor.u32 256, 16
    %1161 = vbcast.lane.b32.xlu0 %v1151, %s1160
    %v1162 = vpop.permute.xlu0 %1161
    %s1164 = sor.u32 256, 24
    %1165 = vbcast.lane.b32.xlu0 %v1151, %s1164
    %v1166 = vpop.permute.xlu0 %1165
    %s1168 = sor.u32 256, 32
    %1169 = vbcast.lane.b32.xlu0 %v1151, %s1168
    %v1170 = vpop.permute.xlu0 %1169
    %s1172 = sor.u32 256, 40
    %1173 = vbcast.lane.b32.xlu0 %v1151, %s1172
    %v1174 = vpop.permute.xlu0 %1173
    %s1176 = sor.u32 256, 48
    %1177 = vbcast.lane.b32.xlu0 %v1151, %s1176
    %v1178 = vpop.permute.xlu0 %1177
    %s1180 = sor.u32 256, 56
    %1181 = vbcast.lane.b32.xlu0 %v1151, %s1180
    %v1182 = vpop.permute.xlu0 %1181
    %s1184 = sor.u32 256, 64
    %1185 = vbcast.lane.b32.xlu0 %v1151, %s1184
    %v1186 = vpop.permute.xlu0 %1185
    %s1188 = sor.u32 256, 72
    %1189 = vbcast.lane.b32.xlu0 %v1151, %s1188
    %v1190 = vpop.permute.xlu0 %1189
    %s1192 = sor.u32 256, 80
    %1193 = vbcast.lane.b32.xlu0 %v1151, %s1192
    %v1194 = vpop.permute.xlu0 %1193
    %s1196 = sor.u32 256, 88
    %1197 = vbcast.lane.b32.xlu0 %v1151, %s1196
    %v1198 = vpop.permute.xlu0 %1197
    %s1200 = sor.u32 256, 96
    %1201 = vbcast.lane.b32.xlu0 %v1151, %s1200
    %v1202 = vpop.permute.xlu0 %1201
    %s1204 = sor.u32 256, 104
    %1205 = vbcast.lane.b32.xlu0 %v1151, %s1204
    %v1206 = vpop.permute.xlu0 %1205
    %s1208 = sor.u32 256, 112
    %1209 = vbcast.lane.b32.xlu0 %v1151, %s1208
    %v1210 = vpop.permute.xlu0 %1209
    %s1212 = sor.u32 256, 120
    %1213 = vbcast.lane.b32.xlu0 %v1151, %s1212
    %v1214 = vpop.permute.xlu0 %1213
    %v1215 = vlaneseq
    %v1216 = vshrl.u32 %v1215, 7
    %v1217 = vsub.s32 0, %v1216
    %v1218 = vrot.slane %v43, %v1217
    %1220 = vbcast.lane.b32.xlu0 %v1218, 256
    %v1221 = vpop.permute.xlu0 %1220
    %s1223 = sor.u32 256, 8
    %1224 = vbcast.lane.b32.xlu0 %v1218, %s1223
    %v1225 = vpop.permute.xlu0 %1224
    %s1227 = sor.u32 256, 16
    %1228 = vbcast.lane.b32.xlu0 %v1218, %s1227
    %v1229 = vpop.permute.xlu0 %1228
    %s1231 = sor.u32 256, 24
    %1232 = vbcast.lane.b32.xlu0 %v1218, %s1231
    %v1233 = vpop.permute.xlu0 %1232
    %s1235 = sor.u32 256, 32
    %1236 = vbcast.lane.b32.xlu0 %v1218, %s1235
    %v1237 = vpop.permute.xlu0 %1236
    %s1239 = sor.u32 256, 40
    %1240 = vbcast.lane.b32.xlu0 %v1218, %s1239
    %v1241 = vpop.permute.xlu0 %1240
    %s1243 = sor.u32 256, 48
    %1244 = vbcast.lane.b32.xlu0 %v1218, %s1243
    %v1245 = vpop.permute.xlu0 %1244
    %s1247 = sor.u32 256, 56
    %1248 = vbcast.lane.b32.xlu0 %v1218, %s1247
    %v1249 = vpop.permute.xlu0 %1248
    %s1251 = sor.u32 256, 64
    %1252 = vbcast.lane.b32.xlu0 %v1218, %s1251
    %v1253 = vpop.permute.xlu0 %1252
    %s1255 = sor.u32 256, 72
    %1256 = vbcast.lane.b32.xlu0 %v1218, %s1255
    %v1257 = vpop.permute.xlu0 %1256
    %s1259 = sor.u32 256, 80
    %1260 = vbcast.lane.b32.xlu0 %v1218, %s1259
    %v1261 = vpop.permute.xlu0 %1260
    %s1263 = sor.u32 256, 88
    %1264 = vbcast.lane.b32.xlu0 %v1218, %s1263
    %v1265 = vpop.permute.xlu0 %1264
    %s1267 = sor.u32 256, 96
    %1268 = vbcast.lane.b32.xlu0 %v1218, %s1267
    %v1269 = vpop.permute.xlu0 %1268
    %s1271 = sor.u32 256, 104
    %1272 = vbcast.lane.b32.xlu0 %v1218, %s1271
    %v1273 = vpop.permute.xlu0 %1272
    %s1275 = sor.u32 256, 112
    %1276 = vbcast.lane.b32.xlu0 %v1218, %s1275
    %v1277 = vpop.permute.xlu0 %1276
    %s1279 = sor.u32 256, 120
    %1280 = vbcast.lane.b32.xlu0 %v1218, %s1279
    %v1281 = vpop.permute.xlu0 %1280
    %v1282 = vlaneseq
    %v1283 = vshrl.u32 %v1282, 7
    %v1284 = vsub.s32 1, %v1283
    %v1285 = vrot.slane %v42, %v1284
    %1287 = vbcast.lane.b32.xlu0 %v1285, 256
    %v1288 = vpop.permute.xlu0 %1287
    %s1290 = sor.u32 256, 8
    %1291 = vbcast.lane.b32.xlu0 %v1285, %s1290
    %v1292 = vpop.permute.xlu0 %1291
    %s1294 = sor.u32 256, 16
    %1295 = vbcast.lane.b32.xlu0 %v1285, %s1294
    %v1296 = vpop.permute.xlu0 %1295
    %s1298 = sor.u32 256, 24
    %1299 = vbcast.lane.b32.xlu0 %v1285, %s1298
    %v1300 = vpop.permute.xlu0 %1299
    %s1302 = sor.u32 256, 32
    %1303 = vbcast.lane.b32.xlu0 %v1285, %s1302
    %v1304 = vpop.permute.xlu0 %1303
    %s1306 = sor.u32 256, 40
    %1307 = vbcast.lane.b32.xlu0 %v1285, %s1306
    %v1308 = vpop.permute.xlu0 %1307
    %s1310 = sor.u32 256, 48
    %1311 = vbcast.lane.b32.xlu0 %v1285, %s1310
    %v1312 = vpop.permute.xlu0 %1311
    %s1314 = sor.u32 256, 56
    %1315 = vbcast.lane.b32.xlu0 %v1285, %s1314
    %v1316 = vpop.permute.xlu0 %1315
    %s1318 = sor.u32 256, 64
    %1319 = vbcast.lane.b32.xlu0 %v1285, %s1318
    %v1320 = vpop.permute.xlu0 %1319
    %s1322 = sor.u32 256, 72
    %1323 = vbcast.lane.b32.xlu0 %v1285, %s1322
    %v1324 = vpop.permute.xlu0 %1323
    %s1326 = sor.u32 256, 80
    %1327 = vbcast.lane.b32.xlu0 %v1285, %s1326
    %v1328 = vpop.permute.xlu0 %1327
    %s1330 = sor.u32 256, 88
    %1331 = vbcast.lane.b32.xlu0 %v1285, %s1330
    %v1332 = vpop.permute.xlu0 %1331
    %s1334 = sor.u32 256, 96
    %1335 = vbcast.lane.b32.xlu0 %v1285, %s1334
    %v1336 = vpop.permute.xlu0 %1335
    %s1338 = sor.u32 256, 104
    %1339 = vbcast.lane.b32.xlu0 %v1285, %s1338
    %v1340 = vpop.permute.xlu0 %1339
    %s1342 = sor.u32 256, 112
    %1343 = vbcast.lane.b32.xlu0 %v1285, %s1342
    %v1344 = vpop.permute.xlu0 %1343
    %s1346 = sor.u32 256, 120
    %1347 = vbcast.lane.b32.xlu0 %v1285, %s1346
    %v1348 = vpop.permute.xlu0 %1347
    %v1349 = vlaneseq
    %v1350 = vshrl.u32 %v1349, 7
    %v1351 = vsub.s32 1, %v1350
    %v1352 = vrot.slane %v43, %v1351
    %1354 = vbcast.lane.b32.xlu0 %v1352, 256
    %v1355 = vpop.permute.xlu0 %1354
    %s1357 = sor.u32 256, 8
    %1358 = vbcast.lane.b32.xlu0 %v1352, %s1357
    %v1359 = vpop.permute.xlu0 %1358
    %s1361 = sor.u32 256, 16
    %1362 = vbcast.lane.b32.xlu0 %v1352, %s1361
    %v1363 = vpop.permute.xlu0 %1362
    %s1365 = sor.u32 256, 24
    %1366 = vbcast.lane.b32.xlu0 %v1352, %s1365
    %v1367 = vpop.permute.xlu0 %1366
    %s1369 = sor.u32 256, 32
    %1370 = vbcast.lane.b32.xlu0 %v1352, %s1369
    %v1371 = vpop.permute.xlu0 %1370
    %s1373 = sor.u32 256, 40
    %1374 = vbcast.lane.b32.xlu0 %v1352, %s1373
    %v1375 = vpop.permute.xlu0 %1374
    %s1377 = sor.u32 256, 48
    %1378 = vbcast.lane.b32.xlu0 %v1352, %s1377
    %v1379 = vpop.permute.xlu0 %1378
    %s1381 = sor.u32 256, 56
    %1382 = vbcast.lane.b32.xlu0 %v1352, %s1381
    %v1383 = vpop.permute.xlu0 %1382
    %s1385 = sor.u32 256, 64
    %1386 = vbcast.lane.b32.xlu0 %v1352, %s1385
    %v1387 = vpop.permute.xlu0 %1386
    %s1389 = sor.u32 256, 72
    %1390 = vbcast.lane.b32.xlu0 %v1352, %s1389
    %v1391 = vpop.permute.xlu0 %1390
    %s1393 = sor.u32 256, 80
    %1394 = vbcast.lane.b32.xlu0 %v1352, %s1393
    %v1395 = vpop.permute.xlu0 %1394
    %s1397 = sor.u32 256, 88
    %1398 = vbcast.lane.b32.xlu0 %v1352, %s1397
    %v1399 = vpop.permute.xlu0 %1398
    %s1401 = sor.u32 256, 96
    %1402 = vbcast.lane.b32.xlu0 %v1352, %s1401
    %v1403 = vpop.permute.xlu0 %1402
    %s1405 = sor.u32 256, 104
    %1406 = vbcast.lane.b32.xlu0 %v1352, %s1405
    %v1407 = vpop.permute.xlu0 %1406
    %s1409 = sor.u32 256, 112
    %1410 = vbcast.lane.b32.xlu0 %v1352, %s1409
    %v1411 = vpop.permute.xlu0 %1410
    %s1413 = sor.u32 256, 120
    %1414 = vbcast.lane.b32.xlu0 %v1352, %s1413
    %v1415 = vpop.permute.xlu0 %1414
    %v1416 = vlaneseq
    %v1417 = vshrl.u32 %v1416, 7
    %v1418 = vsub.s32 2, %v1417
    %v1419 = vrot.slane %v42, %v1418
    %1421 = vbcast.lane.b32.xlu0 %v1419, 256
    %v1422 = vpop.permute.xlu0 %1421
    %s1424 = sor.u32 256, 8
    %1425 = vbcast.lane.b32.xlu0 %v1419, %s1424
    %v1426 = vpop.permute.xlu0 %1425
    %s1428 = sor.u32 256, 16
    %1429 = vbcast.lane.b32.xlu0 %v1419, %s1428
    %v1430 = vpop.permute.xlu0 %1429
    %s1432 = sor.u32 256, 24
    %1433 = vbcast.lane.b32.xlu0 %v1419, %s1432
    %v1434 = vpop.permute.xlu0 %1433
    %s1436 = sor.u32 256, 32
    %1437 = vbcast.lane.b32.xlu0 %v1419, %s1436
    %v1438 = vpop.permute.xlu0 %1437
    %s1440 = sor.u32 256, 40
    %1441 = vbcast.lane.b32.xlu0 %v1419, %s1440
    %v1442 = vpop.permute.xlu0 %1441
    %s1444 = sor.u32 256, 48
    %1445 = vbcast.lane.b32.xlu0 %v1419, %s1444
    %v1446 = vpop.permute.xlu0 %1445
    %s1448 = sor.u32 256, 56
    %1449 = vbcast.lane.b32.xlu0 %v1419, %s1448
    %v1450 = vpop.permute.xlu0 %1449
    %s1452 = sor.u32 256, 64
    %1453 = vbcast.lane.b32.xlu0 %v1419, %s1452
    %v1454 = vpop.permute.xlu0 %1453
    %s1456 = sor.u32 256, 72
    %1457 = vbcast.lane.b32.xlu0 %v1419, %s1456
    %v1458 = vpop.permute.xlu0 %1457
    %s1460 = sor.u32 256, 80
    %1461 = vbcast.lane.b32.xlu0 %v1419, %s1460
    %v1462 = vpop.permute.xlu0 %1461
    %s1464 = sor.u32 256, 88
    %1465 = vbcast.lane.b32.xlu0 %v1419, %s1464
    %v1466 = vpop.permute.xlu0 %1465
    %s1468 = sor.u32 256, 96
    %1469 = vbcast.lane.b32.xlu0 %v1419, %s1468
    %v1470 = vpop.permute.xlu0 %1469
    %s1472 = sor.u32 256, 104
    %1473 = vbcast.lane.b32.xlu0 %v1419, %s1472
    %v1474 = vpop.permute.xlu0 %1473
    %s1476 = sor.u32 256, 112
    %1477 = vbcast.lane.b32.xlu0 %v1419, %s1476
    %v1478 = vpop.permute.xlu0 %1477
    %s1480 = sor.u32 256, 120
    %1481 = vbcast.lane.b32.xlu0 %v1419, %s1480
    %v1482 = vpop.permute.xlu0 %1481
    %v1483 = vlaneseq
    %v1484 = vshrl.u32 %v1483, 7
    %v1485 = vsub.s32 2, %v1484
    %v1486 = vrot.slane %v43, %v1485
    %1488 = vbcast.lane.b32.xlu0 %v1486, 256
    %v1489 = vpop.permute.xlu0 %1488
    %s1491 = sor.u32 256, 8
    %1492 = vbcast.lane.b32.xlu0 %v1486, %s1491
    %v1493 = vpop.permute.xlu0 %1492
    %s1495 = sor.u32 256, 16
    %1496 = vbcast.lane.b32.xlu0 %v1486, %s1495
    %v1497 = vpop.permute.xlu0 %1496
    %s1499 = sor.u32 256, 24
    %1500 = vbcast.lane.b32.xlu0 %v1486, %s1499
    %v1501 = vpop.permute.xlu0 %1500
    %s1503 = sor.u32 256, 32
    %1504 = vbcast.lane.b32.xlu0 %v1486, %s1503
    %v1505 = vpop.permute.xlu0 %1504
    %s1507 = sor.u32 256, 40
    %1508 = vbcast.lane.b32.xlu0 %v1486, %s1507
    %v1509 = vpop.permute.xlu0 %1508
    %s1511 = sor.u32 256, 48
    %1512 = vbcast.lane.b32.xlu0 %v1486, %s1511
    %v1513 = vpop.permute.xlu0 %1512
    %s1515 = sor.u32 256, 56
    %1516 = vbcast.lane.b32.xlu0 %v1486, %s1515
    %v1517 = vpop.permute.xlu0 %1516
    %s1519 = sor.u32 256, 64
    %1520 = vbcast.lane.b32.xlu0 %v1486, %s1519
    %v1521 = vpop.permute.xlu0 %1520
    %s1523 = sor.u32 256, 72
    %1524 = vbcast.lane.b32.xlu0 %v1486, %s1523
    %v1525 = vpop.permute.xlu0 %1524
    %s1527 = sor.u32 256, 80
    %1528 = vbcast.lane.b32.xlu0 %v1486, %s1527
    %v1529 = vpop.permute.xlu0 %1528
    %s1531 = sor.u32 256, 88
    %1532 = vbcast.lane.b32.xlu0 %v1486, %s1531
    %v1533 = vpop.permute.xlu0 %1532
    %s1535 = sor.u32 256, 96
    %1536 = vbcast.lane.b32.xlu0 %v1486, %s1535
    %v1537 = vpop.permute.xlu0 %1536
    %s1539 = sor.u32 256, 104
    %1540 = vbcast.lane.b32.xlu0 %v1486, %s1539
    %v1541 = vpop.permute.xlu0 %1540
    %s1543 = sor.u32 256, 112
    %1544 = vbcast.lane.b32.xlu0 %v1486, %s1543
    %v1545 = vpop.permute.xlu0 %1544
    %s1547 = sor.u32 256, 120
    %1548 = vbcast.lane.b32.xlu0 %v1486, %s1547
    %v1549 = vpop.permute.xlu0 %1548
    %v1550 = vlaneseq
    %v1551 = vshrl.u32 %v1550, 7
    %v1552 = vsub.s32 3, %v1551
    %v1553 = vrot.slane %v42, %v1552
    %1555 = vbcast.lane.b32.xlu0 %v1553, 256
    %v1556 = vpop.permute.xlu0 %1555
    %s1558 = sor.u32 256, 8
    %1559 = vbcast.lane.b32.xlu0 %v1553, %s1558
    %v1560 = vpop.permute.xlu0 %1559
    %s1562 = sor.u32 256, 16
    %1563 = vbcast.lane.b32.xlu0 %v1553, %s1562
    %v1564 = vpop.permute.xlu0 %1563
    %s1566 = sor.u32 256, 24
    %1567 = vbcast.lane.b32.xlu0 %v1553, %s1566
    %v1568 = vpop.permute.xlu0 %1567
    %s1570 = sor.u32 256, 32
    %1571 = vbcast.lane.b32.xlu0 %v1553, %s1570
    %v1572 = vpop.permute.xlu0 %1571
    %s1574 = sor.u32 256, 40
    %1575 = vbcast.lane.b32.xlu0 %v1553, %s1574
    %v1576 = vpop.permute.xlu0 %1575
    %s1578 = sor.u32 256, 48
    %1579 = vbcast.lane.b32.xlu0 %v1553, %s1578
    %v1580 = vpop.permute.xlu0 %1579
    %s1582 = sor.u32 256, 56
    %1583 = vbcast.lane.b32.xlu0 %v1553, %s1582
    %v1584 = vpop.permute.xlu0 %1583
    %s1586 = sor.u32 256, 64
    %1587 = vbcast.lane.b32.xlu0 %v1553, %s1586
    %v1588 = vpop.permute.xlu0 %1587
    %s1590 = sor.u32 256, 72
    %1591 = vbcast.lane.b32.xlu0 %v1553, %s1590
    %v1592 = vpop.permute.xlu0 %1591
    %s1594 = sor.u32 256, 80
    %1595 = vbcast.lane.b32.xlu0 %v1553, %s1594
    %v1596 = vpop.permute.xlu0 %1595
    %s1598 = sor.u32 256, 88
    %1599 = vbcast.lane.b32.xlu0 %v1553, %s1598
    %v1600 = vpop.permute.xlu0 %1599
    %s1602 = sor.u32 256, 96
    %1603 = vbcast.lane.b32.xlu0 %v1553, %s1602
    %v1604 = vpop.permute.xlu0 %1603
    %s1606 = sor.u32 256, 104
    %1607 = vbcast.lane.b32.xlu0 %v1553, %s1606
    %v1608 = vpop.permute.xlu0 %1607
    %s1610 = sor.u32 256, 112
    %1611 = vbcast.lane.b32.xlu0 %v1553, %s1610
    %v1612 = vpop.permute.xlu0 %1611
    %s1614 = sor.u32 256, 120
    %1615 = vbcast.lane.b32.xlu0 %v1553, %s1614
    %v1616 = vpop.permute.xlu0 %1615
    %v1617 = vlaneseq
    %v1618 = vshrl.u32 %v1617, 7
    %v1619 = vsub.s32 3, %v1618
    %v1620 = vrot.slane %v43, %v1619
    %1622 = vbcast.lane.b32.xlu0 %v1620, 256
    %v1623 = vpop.permute.xlu0 %1622
    %s1625 = sor.u32 256, 8
    %1626 = vbcast.lane.b32.xlu0 %v1620, %s1625
    %v1627 = vpop.permute.xlu0 %1626
    %s1629 = sor.u32 256, 16
    %1630 = vbcast.lane.b32.xlu0 %v1620, %s1629
    %v1631 = vpop.permute.xlu0 %1630
    %s1633 = sor.u32 256, 24
    %1634 = vbcast.lane.b32.xlu0 %v1620, %s1633
    %v1635 = vpop.permute.xlu0 %1634
    %s1637 = sor.u32 256, 32
    %1638 = vbcast.lane.b32.xlu0 %v1620, %s1637
    %v1639 = vpop.permute.xlu0 %1638
    %s1641 = sor.u32 256, 40
    %1642 = vbcast.lane.b32.xlu0 %v1620, %s1641
    %v1643 = vpop.permute.xlu0 %1642
    %s1645 = sor.u32 256, 48
    %1646 = vbcast.lane.b32.xlu0 %v1620, %s1645
    %v1647 = vpop.permute.xlu0 %1646
    %s1649 = sor.u32 256, 56
    %1650 = vbcast.lane.b32.xlu0 %v1620, %s1649
    %v1651 = vpop.permute.xlu0 %1650
    %s1653 = sor.u32 256, 64
    %1654 = vbcast.lane.b32.xlu0 %v1620, %s1653
    %v1655 = vpop.permute.xlu0 %1654
    %s1657 = sor.u32 256, 72
    %1658 = vbcast.lane.b32.xlu0 %v1620, %s1657
    %v1659 = vpop.permute.xlu0 %1658
    %s1661 = sor.u32 256, 80
    %1662 = vbcast.lane.b32.xlu0 %v1620, %s1661
    %v1663 = vpop.permute.xlu0 %1662
    %s1665 = sor.u32 256, 88
    %1666 = vbcast.lane.b32.xlu0 %v1620, %s1665
    %v1667 = vpop.permute.xlu0 %1666
    %s1669 = sor.u32 256, 96
    %1670 = vbcast.lane.b32.xlu0 %v1620, %s1669
    %v1671 = vpop.permute.xlu0 %1670
    %s1673 = sor.u32 256, 104
    %1674 = vbcast.lane.b32.xlu0 %v1620, %s1673
    %v1675 = vpop.permute.xlu0 %1674
    %s1677 = sor.u32 256, 112
    %1678 = vbcast.lane.b32.xlu0 %v1620, %s1677
    %v1679 = vpop.permute.xlu0 %1678
    %s1681 = sor.u32 256, 120
    %1682 = vbcast.lane.b32.xlu0 %v1620, %s1681
    %v1683 = vpop.permute.xlu0 %1682
    %v1684 = vlaneseq
    %v1685 = vshrl.u32 %v1684, 7
    %v1686 = vsub.s32 4, %v1685
    %v1687 = vrot.slane %v42, %v1686
    %1689 = vbcast.lane.b32.xlu0 %v1687, 256
    %v1690 = vpop.permute.xlu0 %1689
    %s1692 = sor.u32 256, 8
    %1693 = vbcast.lane.b32.xlu0 %v1687, %s1692
    %v1694 = vpop.permute.xlu0 %1693
    %s1696 = sor.u32 256, 16
    %1697 = vbcast.lane.b32.xlu0 %v1687, %s1696
    %v1698 = vpop.permute.xlu0 %1697
    %s1700 = sor.u32 256, 24
    %1701 = vbcast.lane.b32.xlu0 %v1687, %s1700
    %v1702 = vpop.permute.xlu0 %1701
    %s1704 = sor.u32 256, 32
    %1705 = vbcast.lane.b32.xlu0 %v1687, %s1704
    %v1706 = vpop.permute.xlu0 %1705
    %s1708 = sor.u32 256, 40
    %1709 = vbcast.lane.b32.xlu0 %v1687, %s1708
    %v1710 = vpop.permute.xlu0 %1709
    %s1712 = sor.u32 256, 48
    %1713 = vbcast.lane.b32.xlu0 %v1687, %s1712
    %v1714 = vpop.permute.xlu0 %1713
    %s1716 = sor.u32 256, 56
    %1717 = vbcast.lane.b32.xlu0 %v1687, %s1716
    %v1718 = vpop.permute.xlu0 %1717
    %s1720 = sor.u32 256, 64
    %1721 = vbcast.lane.b32.xlu0 %v1687, %s1720
    %v1722 = vpop.permute.xlu0 %1721
    %s1724 = sor.u32 256, 72
    %1725 = vbcast.lane.b32.xlu0 %v1687, %s1724
    %v1726 = vpop.permute.xlu0 %1725
    %s1728 = sor.u32 256, 80
    %1729 = vbcast.lane.b32.xlu0 %v1687, %s1728
    %v1730 = vpop.permute.xlu0 %1729
    %s1732 = sor.u32 256, 88
    %1733 = vbcast.lane.b32.xlu0 %v1687, %s1732
    %v1734 = vpop.permute.xlu0 %1733
    %s1736 = sor.u32 256, 96
    %1737 = vbcast.lane.b32.xlu0 %v1687, %s1736
    %v1738 = vpop.permute.xlu0 %1737
    %s1740 = sor.u32 256, 104
    %1741 = vbcast.lane.b32.xlu0 %v1687, %s1740
    %v1742 = vpop.permute.xlu0 %1741
    %s1744 = sor.u32 256, 112
    %1745 = vbcast.lane.b32.xlu0 %v1687, %s1744
    %v1746 = vpop.permute.xlu0 %1745
    %s1748 = sor.u32 256, 120
    %1749 = vbcast.lane.b32.xlu0 %v1687, %s1748
    %v1750 = vpop.permute.xlu0 %1749
    %v1751 = vlaneseq
    %v1752 = vshrl.u32 %v1751, 7
    %v1753 = vsub.s32 4, %v1752
    %v1754 = vrot.slane %v43, %v1753
    %1756 = vbcast.lane.b32.xlu0 %v1754, 256
    %v1757 = vpop.permute.xlu0 %1756
    %s1759 = sor.u32 256, 8
    %1760 = vbcast.lane.b32.xlu0 %v1754, %s1759
    %v1761 = vpop.permute.xlu0 %1760
    %s1763 = sor.u32 256, 16
    %1764 = vbcast.lane.b32.xlu0 %v1754, %s1763
    %v1765 = vpop.permute.xlu0 %1764
    %s1767 = sor.u32 256, 24
    %1768 = vbcast.lane.b32.xlu0 %v1754, %s1767
    %v1769 = vpop.permute.xlu0 %1768
    %s1771 = sor.u32 256, 32
    %1772 = vbcast.lane.b32.xlu0 %v1754, %s1771
    %v1773 = vpop.permute.xlu0 %1772
    %s1775 = sor.u32 256, 40
    %1776 = vbcast.lane.b32.xlu0 %v1754, %s1775
    %v1777 = vpop.permute.xlu0 %1776
    %s1779 = sor.u32 256, 48
    %1780 = vbcast.lane.b32.xlu0 %v1754, %s1779
    %v1781 = vpop.permute.xlu0 %1780
    %s1783 = sor.u32 256, 56
    %1784 = vbcast.lane.b32.xlu0 %v1754, %s1783
    %v1785 = vpop.permute.xlu0 %1784
    %s1787 = sor.u32 256, 64
    %1788 = vbcast.lane.b32.xlu0 %v1754, %s1787
    %v1789 = vpop.permute.xlu0 %1788
    %s1791 = sor.u32 256, 72
    %1792 = vbcast.lane.b32.xlu0 %v1754, %s1791
    %v1793 = vpop.permute.xlu0 %1792
    %s1795 = sor.u32 256, 80
    %1796 = vbcast.lane.b32.xlu0 %v1754, %s1795
    %v1797 = vpop.permute.xlu0 %1796
    %s1799 = sor.u32 256, 88
    %1800 = vbcast.lane.b32.xlu0 %v1754, %s1799
    %v1801 = vpop.permute.xlu0 %1800
    %s1803 = sor.u32 256, 96
    %1804 = vbcast.lane.b32.xlu0 %v1754, %s1803
    %v1805 = vpop.permute.xlu0 %1804
    %s1807 = sor.u32 256, 104
    %1808 = vbcast.lane.b32.xlu0 %v1754, %s1807
    %v1809 = vpop.permute.xlu0 %1808
    %s1811 = sor.u32 256, 112
    %1812 = vbcast.lane.b32.xlu0 %v1754, %s1811
    %v1813 = vpop.permute.xlu0 %1812
    %s1815 = sor.u32 256, 120
    %1816 = vbcast.lane.b32.xlu0 %v1754, %s1815
    %v1817 = vpop.permute.xlu0 %1816
    %v1818 = vlaneseq
    %v1819 = vshrl.u32 %v1818, 7
    %v1820 = vsub.s32 5, %v1819
    %v1821 = vrot.slane %v42, %v1820
    %1823 = vbcast.lane.b32.xlu0 %v1821, 256
    %v1824 = vpop.permute.xlu0 %1823
    %s1826 = sor.u32 256, 8
    %1827 = vbcast.lane.b32.xlu0 %v1821, %s1826
    %v1828 = vpop.permute.xlu0 %1827
    %s1830 = sor.u32 256, 16
    %1831 = vbcast.lane.b32.xlu0 %v1821, %s1830
    %v1832 = vpop.permute.xlu0 %1831
    %s1834 = sor.u32 256, 24
    %1835 = vbcast.lane.b32.xlu0 %v1821, %s1834
    %v1836 = vpop.permute.xlu0 %1835
    %s1838 = sor.u32 256, 32
    %1839 = vbcast.lane.b32.xlu0 %v1821, %s1838
    %v1840 = vpop.permute.xlu0 %1839
    %s1842 = sor.u32 256, 40
    %1843 = vbcast.lane.b32.xlu0 %v1821, %s1842
    %v1844 = vpop.permute.xlu0 %1843
    %s1846 = sor.u32 256, 48
    %1847 = vbcast.lane.b32.xlu0 %v1821, %s1846
    %v1848 = vpop.permute.xlu0 %1847
    %s1850 = sor.u32 256, 56
    %1851 = vbcast.lane.b32.xlu0 %v1821, %s1850
    %v1852 = vpop.permute.xlu0 %1851
    %s1854 = sor.u32 256, 64
    %1855 = vbcast.lane.b32.xlu0 %v1821, %s1854
    %v1856 = vpop.permute.xlu0 %1855
    %s1858 = sor.u32 256, 72
    %1859 = vbcast.lane.b32.xlu0 %v1821, %s1858
    %v1860 = vpop.permute.xlu0 %1859
    %s1862 = sor.u32 256, 80
    %1863 = vbcast.lane.b32.xlu0 %v1821, %s1862
    %v1864 = vpop.permute.xlu0 %1863
    %s1866 = sor.u32 256, 88
    %1867 = vbcast.lane.b32.xlu0 %v1821, %s1866
    %v1868 = vpop.permute.xlu0 %1867
    %s1870 = sor.u32 256, 96
    %1871 = vbcast.lane.b32.xlu0 %v1821, %s1870
    %v1872 = vpop.permute.xlu0 %1871
    %s1874 = sor.u32 256, 104
    %1875 = vbcast.lane.b32.xlu0 %v1821, %s1874
    %v1876 = vpop.permute.xlu0 %1875
    %s1878 = sor.u32 256, 112
    %1879 = vbcast.lane.b32.xlu0 %v1821, %s1878
    %v1880 = vpop.permute.xlu0 %1879
    %s1882 = sor.u32 256, 120
    %1883 = vbcast.lane.b32.xlu0 %v1821, %s1882
    %v1884 = vpop.permute.xlu0 %1883
    %v1885 = vlaneseq
    %v1886 = vshrl.u32 %v1885, 7
    %v1887 = vsub.s32 5, %v1886
    %v1888 = vrot.slane %v43, %v1887
    %1890 = vbcast.lane.b32.xlu0 %v1888, 256
    %v1891 = vpop.permute.xlu0 %1890
    %s1893 = sor.u32 256, 8
    %1894 = vbcast.lane.b32.xlu0 %v1888, %s1893
    %v1895 = vpop.permute.xlu0 %1894
    %s1897 = sor.u32 256, 16
    %1898 = vbcast.lane.b32.xlu0 %v1888, %s1897
    %v1899 = vpop.permute.xlu0 %1898
    %s1901 = sor.u32 256, 24
    %1902 = vbcast.lane.b32.xlu0 %v1888, %s1901
    %v1903 = vpop.permute.xlu0 %1902
    %s1905 = sor.u32 256, 32
    %1906 = vbcast.lane.b32.xlu0 %v1888, %s1905
    %v1907 = vpop.permute.xlu0 %1906
    %s1909 = sor.u32 256, 40
    %1910 = vbcast.lane.b32.xlu0 %v1888, %s1909
    %v1911 = vpop.permute.xlu0 %1910
    %s1913 = sor.u32 256, 48
    %1914 = vbcast.lane.b32.xlu0 %v1888, %s1913
    %v1915 = vpop.permute.xlu0 %1914
    %s1917 = sor.u32 256, 56
    %1918 = vbcast.lane.b32.xlu0 %v1888, %s1917
    %v1919 = vpop.permute.xlu0 %1918
    %s1921 = sor.u32 256, 64
    %1922 = vbcast.lane.b32.xlu0 %v1888, %s1921
    %v1923 = vpop.permute.xlu0 %1922
    %s1925 = sor.u32 256, 72
    %1926 = vbcast.lane.b32.xlu0 %v1888, %s1925
    %v1927 = vpop.permute.xlu0 %1926
    %s1929 = sor.u32 256, 80
    %1930 = vbcast.lane.b32.xlu0 %v1888, %s1929
    %v1931 = vpop.permute.xlu0 %1930
    %s1933 = sor.u32 256, 88
    %1934 = vbcast.lane.b32.xlu0 %v1888, %s1933
    %v1935 = vpop.permute.xlu0 %1934
    %s1937 = sor.u32 256, 96
    %1938 = vbcast.lane.b32.xlu0 %v1888, %s1937
    %v1939 = vpop.permute.xlu0 %1938
    %s1941 = sor.u32 256, 104
    %1942 = vbcast.lane.b32.xlu0 %v1888, %s1941
    %v1943 = vpop.permute.xlu0 %1942
    %s1945 = sor.u32 256, 112
    %1946 = vbcast.lane.b32.xlu0 %v1888, %s1945
    %v1947 = vpop.permute.xlu0 %1946
    %s1949 = sor.u32 256, 120
    %1950 = vbcast.lane.b32.xlu0 %v1888, %s1949
    %v1951 = vpop.permute.xlu0 %1950
    %v1952 = vlaneseq
    %v1953 = vshrl.u32 %v1952, 7
    %v1954 = vsub.s32 6, %v1953
    %v1955 = vrot.slane %v42, %v1954
    %1957 = vbcast.lane.b32.xlu0 %v1955, 256
    %v1958 = vpop.permute.xlu0 %1957
    %s1960 = sor.u32 256, 8
    %1961 = vbcast.lane.b32.xlu0 %v1955, %s1960
    %v1962 = vpop.permute.xlu0 %1961
    %s1964 = sor.u32 256, 16
    %1965 = vbcast.lane.b32.xlu0 %v1955, %s1964
    %v1966 = vpop.permute.xlu0 %1965
    %s1968 = sor.u32 256, 24
    %1969 = vbcast.lane.b32.xlu0 %v1955, %s1968
    %v1970 = vpop.permute.xlu0 %1969
    %s1972 = sor.u32 256, 32
    %1973 = vbcast.lane.b32.xlu0 %v1955, %s1972
    %v1974 = vpop.permute.xlu0 %1973
    %s1976 = sor.u32 256, 40
    %1977 = vbcast.lane.b32.xlu0 %v1955, %s1976
    %v1978 = vpop.permute.xlu0 %1977
    %s1980 = sor.u32 256, 48
    %1981 = vbcast.lane.b32.xlu0 %v1955, %s1980
    %v1982 = vpop.permute.xlu0 %1981
    %s1984 = sor.u32 256, 56
    %1985 = vbcast.lane.b32.xlu0 %v1955, %s1984
    %v1986 = vpop.permute.xlu0 %1985
    %s1988 = sor.u32 256, 64
    %1989 = vbcast.lane.b32.xlu0 %v1955, %s1988
    %v1990 = vpop.permute.xlu0 %1989
    %s1992 = sor.u32 256, 72
    %1993 = vbcast.lane.b32.xlu0 %v1955, %s1992
    %v1994 = vpop.permute.xlu0 %1993
    %s1996 = sor.u32 256, 80
    %1997 = vbcast.lane.b32.xlu0 %v1955, %s1996
    %v1998 = vpop.permute.xlu0 %1997
    %s2000 = sor.u32 256, 88
    %2001 = vbcast.lane.b32.xlu0 %v1955, %s2000
    %v2002 = vpop.permute.xlu0 %2001
    %s2004 = sor.u32 256, 96
    %2005 = vbcast.lane.b32.xlu0 %v1955, %s2004
    %v2006 = vpop.permute.xlu0 %2005
    %s2008 = sor.u32 256, 104
    %2009 = vbcast.lane.b32.xlu0 %v1955, %s2008
    %v2010 = vpop.permute.xlu0 %2009
    %s2012 = sor.u32 256, 112
    %2013 = vbcast.lane.b32.xlu0 %v1955, %s2012
    %v2014 = vpop.permute.xlu0 %2013
    %s2016 = sor.u32 256, 120
    %2017 = vbcast.lane.b32.xlu0 %v1955, %s2016
    %v2018 = vpop.permute.xlu0 %2017
    %v2019 = vlaneseq
    %v2020 = vshrl.u32 %v2019, 7
    %v2021 = vsub.s32 6, %v2020
    %v2022 = vrot.slane %v43, %v2021
    %2024 = vbcast.lane.b32.xlu0 %v2022, 256
    %v2025 = vpop.permute.xlu0 %2024
    %s2027 = sor.u32 256, 8
    %2028 = vbcast.lane.b32.xlu0 %v2022, %s2027
    %v2029 = vpop.permute.xlu0 %2028
    %s2031 = sor.u32 256, 16
    %2032 = vbcast.lane.b32.xlu0 %v2022, %s2031
    %v2033 = vpop.permute.xlu0 %2032
    %s2035 = sor.u32 256, 24
    %2036 = vbcast.lane.b32.xlu0 %v2022, %s2035
    %v2037 = vpop.permute.xlu0 %2036
    %s2039 = sor.u32 256, 32
    %2040 = vbcast.lane.b32.xlu0 %v2022, %s2039
    %v2041 = vpop.permute.xlu0 %2040
    %s2043 = sor.u32 256, 40
    %2044 = vbcast.lane.b32.xlu0 %v2022, %s2043
    %v2045 = vpop.permute.xlu0 %2044
    %s2047 = sor.u32 256, 48
    %2048 = vbcast.lane.b32.xlu0 %v2022, %s2047
    %v2049 = vpop.permute.xlu0 %2048
    %s2051 = sor.u32 256, 56
    %2052 = vbcast.lane.b32.xlu0 %v2022, %s2051
    %v2053 = vpop.permute.xlu0 %2052
    %s2055 = sor.u32 256, 64
    %2056 = vbcast.lane.b32.xlu0 %v2022, %s2055
    %v2057 = vpop.permute.xlu0 %2056
    %s2059 = sor.u32 256, 72
    %2060 = vbcast.lane.b32.xlu0 %v2022, %s2059
    %v2061 = vpop.permute.xlu0 %2060
    %s2063 = sor.u32 256, 80
    %2064 = vbcast.lane.b32.xlu0 %v2022, %s2063
    %v2065 = vpop.permute.xlu0 %2064
    %s2067 = sor.u32 256, 88
    %2068 = vbcast.lane.b32.xlu0 %v2022, %s2067
    %v2069 = vpop.permute.xlu0 %2068
    %s2071 = sor.u32 256, 96
    %2072 = vbcast.lane.b32.xlu0 %v2022, %s2071
    %v2073 = vpop.permute.xlu0 %2072
    %s2075 = sor.u32 256, 104
    %2076 = vbcast.lane.b32.xlu0 %v2022, %s2075
    %v2077 = vpop.permute.xlu0 %2076
    %s2079 = sor.u32 256, 112
    %2080 = vbcast.lane.b32.xlu0 %v2022, %s2079
    %v2081 = vpop.permute.xlu0 %2080
    %s2083 = sor.u32 256, 120
    %2084 = vbcast.lane.b32.xlu0 %v2022, %s2083
    %v2085 = vpop.permute.xlu0 %2084
    %v2086 = vlaneseq
    %v2087 = vshrl.u32 %v2086, 7
    %v2088 = vsub.s32 7, %v2087
    %v2089 = vrot.slane %v42, %v2088
    %2091 = vbcast.lane.b32.xlu0 %v2089, 256
    %v2092 = vpop.permute.xlu0 %2091
    %s2094 = sor.u32 256, 8
    %2095 = vbcast.lane.b32.xlu0 %v2089, %s2094
    %v2096 = vpop.permute.xlu0 %2095
    %s2098 = sor.u32 256, 16
    %2099 = vbcast.lane.b32.xlu0 %v2089, %s2098
    %v2100 = vpop.permute.xlu0 %2099
    %s2102 = sor.u32 256, 24
    %2103 = vbcast.lane.b32.xlu0 %v2089, %s2102
    %v2104 = vpop.permute.xlu0 %2103
    %s2106 = sor.u32 256, 32
    %2107 = vbcast.lane.b32.xlu0 %v2089, %s2106
    %v2108 = vpop.permute.xlu0 %2107
    %s2110 = sor.u32 256, 40
    %2111 = vbcast.lane.b32.xlu0 %v2089, %s2110
    %v2112 = vpop.permute.xlu0 %2111
    %s2114 = sor.u32 256, 48
    %2115 = vbcast.lane.b32.xlu0 %v2089, %s2114
    %v2116 = vpop.permute.xlu0 %2115
    %s2118 = sor.u32 256, 56
    %2119 = vbcast.lane.b32.xlu0 %v2089, %s2118
    %v2120 = vpop.permute.xlu0 %2119
    %s2122 = sor.u32 256, 64
    %2123 = vbcast.lane.b32.xlu0 %v2089, %s2122
    %v2124 = vpop.permute.xlu0 %2123
    %s2126 = sor.u32 256, 72
    %2127 = vbcast.lane.b32.xlu0 %v2089, %s2126
    %v2128 = vpop.permute.xlu0 %2127
    %s2130 = sor.u32 256, 80
    %2131 = vbcast.lane.b32.xlu0 %v2089, %s2130
    %v2132 = vpop.permute.xlu0 %2131
    %s2134 = sor.u32 256, 88
    %2135 = vbcast.lane.b32.xlu0 %v2089, %s2134
    %v2136 = vpop.permute.xlu0 %2135
    %s2138 = sor.u32 256, 96
    %2139 = vbcast.lane.b32.xlu0 %v2089, %s2138
    %v2140 = vpop.permute.xlu0 %2139
    %s2142 = sor.u32 256, 104
    %2143 = vbcast.lane.b32.xlu0 %v2089, %s2142
    %v2144 = vpop.permute.xlu0 %2143
    %s2146 = sor.u32 256, 112
    %2147 = vbcast.lane.b32.xlu0 %v2089, %s2146
    %v2148 = vpop.permute.xlu0 %2147
    %s2150 = sor.u32 256, 120
    %2151 = vbcast.lane.b32.xlu0 %v2089, %s2150
    %v2152 = vpop.permute.xlu0 %2151
    %v2153 = vlaneseq
    %v2154 = vshrl.u32 %v2153, 7
    %v2155 = vsub.s32 7, %v2154
    %v2156 = vrot.slane %v43, %v2155
    %2158 = vbcast.lane.b32.xlu0 %v2156, 256
    %v2159 = vpop.permute.xlu0 %2158
    %s2161 = sor.u32 256, 8
    %2162 = vbcast.lane.b32.xlu0 %v2156, %s2161
    %v2163 = vpop.permute.xlu0 %2162
    %s2165 = sor.u32 256, 16
    %2166 = vbcast.lane.b32.xlu0 %v2156, %s2165
    %v2167 = vpop.permute.xlu0 %2166
    %s2169 = sor.u32 256, 24
    %2170 = vbcast.lane.b32.xlu0 %v2156, %s2169
    %v2171 = vpop.permute.xlu0 %2170
    %s2173 = sor.u32 256, 32
    %2174 = vbcast.lane.b32.xlu0 %v2156, %s2173
    %v2175 = vpop.permute.xlu0 %2174
    %s2177 = sor.u32 256, 40
    %2178 = vbcast.lane.b32.xlu0 %v2156, %s2177
    %v2179 = vpop.permute.xlu0 %2178
    %s2181 = sor.u32 256, 48
    %2182 = vbcast.lane.b32.xlu0 %v2156, %s2181
    %v2183 = vpop.permute.xlu0 %2182
    %s2185 = sor.u32 256, 56
    %2186 = vbcast.lane.b32.xlu0 %v2156, %s2185
    %v2187 = vpop.permute.xlu0 %2186
    %s2189 = sor.u32 256, 64
    %2190 = vbcast.lane.b32.xlu0 %v2156, %s2189
    %v2191 = vpop.permute.xlu0 %2190
    %s2193 = sor.u32 256, 72
    %2194 = vbcast.lane.b32.xlu0 %v2156, %s2193
    %v2195 = vpop.permute.xlu0 %2194
    %s2197 = sor.u32 256, 80
    %2198 = vbcast.lane.b32.xlu0 %v2156, %s2197
    %v2199 = vpop.permute.xlu0 %2198
    %s2201 = sor.u32 256, 88
    %2202 = vbcast.lane.b32.xlu0 %v2156, %s2201
    %v2203 = vpop.permute.xlu0 %2202
    %s2205 = sor.u32 256, 96
    %2206 = vbcast.lane.b32.xlu0 %v2156, %s2205
    %v2207 = vpop.permute.xlu0 %2206
    %s2209 = sor.u32 256, 104
    %2210 = vbcast.lane.b32.xlu0 %v2156, %s2209
    %v2211 = vpop.permute.xlu0 %2210
    %s2213 = sor.u32 256, 112
    %2214 = vbcast.lane.b32.xlu0 %v2156, %s2213
    %v2215 = vpop.permute.xlu0 %2214
    %s2217 = sor.u32 256, 120
    %2218 = vbcast.lane.b32.xlu0 %v2156, %s2217
    %v2219 = vpop.permute.xlu0 %2218
    %v2220 = vmul.f32 %v82, %v44
    %v2221 = vmul.f32 %v86, %v45
    %v2222 = vmul.f32 %v90, %v46
    %v2223 = vmul.f32 %v94, %v47
    %v2224 = vmul.f32 %v98, %v48
    %v2225 = vmul.f32 %v102, %v49
    %v2226 = vmul.f32 %v106, %v50
    %v2227 = vmul.f32 %v110, %v51
    %v2228 = vmul.f32 %v114, %v52
    %v2229 = vmul.f32 %v118, %v53
    %v2230 = vmul.f32 %v122, %v54
    %v2231 = vmul.f32 %v126, %v55
    %v2232 = vmul.f32 %v130, %v56
    %v2233 = vmul.f32 %v134, %v57
    %v2234 = vmul.f32 %v138, %v58
    %v2235 = vmul.f32 %v142, %v59
    %v2236 = vmul.f32 %v149, %v60
    %v2237 = vmul.f32 %v153, %v61
    %v2238 = vmul.f32 %v157, %v62
    %v2239 = vmul.f32 %v161, %v63
    %v2240 = vmul.f32 %v165, %v64
    %v2241 = vmul.f32 %v169, %v65
    %v2242 = vmul.f32 %v173, %v66
    %v2243 = vmul.f32 %v177, %v67
    %v2244 = vmul.f32 %v181, %v68
    %v2245 = vmul.f32 %v185, %v69
    %v2246 = vmul.f32 %v189, %v70
    %v2247 = vmul.f32 %v193, %v71
    %v2248 = vmul.f32 %v197, %v72
    %v2249 = vmul.f32 %v201, %v73
    %v2250 = vmul.f32 %v205, %v74
    %v2251 = vmul.f32 %v209, %v75
    %v2252 = vmul.f32 %v216, %v44
    %v2253 = vmul.f32 %v220, %v45
    %v2254 = vmul.f32 %v224, %v46
    %v2255 = vmul.f32 %v228, %v47
    %v2256 = vmul.f32 %v232, %v48
    %v2257 = vmul.f32 %v236, %v49
    %v2258 = vmul.f32 %v240, %v50
    %v2259 = vmul.f32 %v244, %v51
    %v2260 = vmul.f32 %v248, %v52
    %v2261 = vmul.f32 %v252, %v53
    %v2262 = vmul.f32 %v256, %v54
    %v2263 = vmul.f32 %v260, %v55
    %v2264 = vmul.f32 %v264, %v56
    %v2265 = vmul.f32 %v268, %v57
    %v2266 = vmul.f32 %v272, %v58
    %v2267 = vmul.f32 %v276, %v59
    %v2268 = vmul.f32 %v283, %v60
    %v2269 = vmul.f32 %v287, %v61
    %v2270 = vmul.f32 %v291, %v62
    %v2271 = vmul.f32 %v295, %v63
    %v2272 = vmul.f32 %v299, %v64
    %v2273 = vmul.f32 %v303, %v65
    %v2274 = vmul.f32 %v307, %v66
    %v2275 = vmul.f32 %v311, %v67
    %v2276 = vmul.f32 %v315, %v68
    %v2277 = vmul.f32 %v319, %v69
    %v2278 = vmul.f32 %v323, %v70
    %v2279 = vmul.f32 %v327, %v71
    %v2280 = vmul.f32 %v331, %v72
    %v2281 = vmul.f32 %v335, %v73
    %v2282 = vmul.f32 %v339, %v74
    %v2283 = vmul.f32 %v343, %v75
    %v2284 = vmul.f32 %v350, %v44
    %v2285 = vmul.f32 %v354, %v45
    %v2286 = vmul.f32 %v358, %v46
    %v2287 = vmul.f32 %v362, %v47
    %v2288 = vmul.f32 %v366, %v48
    %v2289 = vmul.f32 %v370, %v49
    %v2290 = vmul.f32 %v374, %v50
    %v2291 = vmul.f32 %v378, %v51
    %v2292 = vmul.f32 %v382, %v52
    %v2293 = vmul.f32 %v386, %v53
    %v2294 = vmul.f32 %v390, %v54
    %v2295 = vmul.f32 %v394, %v55
    %v2296 = vmul.f32 %v398, %v56
    %v2297 = vmul.f32 %v402, %v57
    %v2298 = vmul.f32 %v406, %v58
    %v2299 = vmul.f32 %v410, %v59
    %v2300 = vmul.f32 %v417, %v60
    %v2301 = vmul.f32 %v421, %v61
    %v2302 = vmul.f32 %v425, %v62
    %v2303 = vmul.f32 %v429, %v63
    %v2304 = vmul.f32 %v433, %v64
    %v2305 = vmul.f32 %v437, %v65
    %v2306 = vmul.f32 %v441, %v66
    %v2307 = vmul.f32 %v445, %v67
    %v2308 = vmul.f32 %v449, %v68
    %v2309 = vmul.f32 %v453, %v69
    %v2310 = vmul.f32 %v457, %v70
    %v2311 = vmul.f32 %v461, %v71
    %v2312 = vmul.f32 %v465, %v72
    %v2313 = vmul.f32 %v469, %v73
    %v2314 = vmul.f32 %v473, %v74
    %v2315 = vmul.f32 %v477, %v75
    %v2316 = vmul.f32 %v484, %v44
    %v2317 = vmul.f32 %v488, %v45
    %v2318 = vmul.f32 %v492, %v46
    %v2319 = vmul.f32 %v496, %v47
    %v2320 = vmul.f32 %v500, %v48
    %v2321 = vmul.f32 %v504, %v49
    %v2322 = vmul.f32 %v508, %v50
    %v2323 = vmul.f32 %v512, %v51
    %v2324 = vmul.f32 %v516, %v52
    %v2325 = vmul.f32 %v520, %v53
    %v2326 = vmul.f32 %v524, %v54
    %v2327 = vmul.f32 %v528, %v55
    %v2328 = vmul.f32 %v532, %v56
    %v2329 = vmul.f32 %v536, %v57
    %v2330 = vmul.f32 %v540, %v58
    %v2331 = vmul.f32 %v544, %v59
    %v2332 = vmul.f32 %v551, %v60
    %v2333 = vmul.f32 %v555, %v61
    %v2334 = vmul.f32 %v559, %v62
    %v2335 = vmul.f32 %v563, %v63
    %v2336 = vmul.f32 %v567, %v64
    %v2337 = vmul.f32 %v571, %v65
    %v2338 = vmul.f32 %v575, %v66
    %v2339 = vmul.f32 %v579, %v67
    %v2340 = vmul.f32 %v583, %v68
    %v2341 = vmul.f32 %v587, %v69
    %v2342 = vmul.f32 %v591, %v70
    %v2343 = vmul.f32 %v595, %v71
    %v2344 = vmul.f32 %v599, %v72
    %v2345 = vmul.f32 %v603, %v73
    %v2346 = vmul.f32 %v607, %v74
    %v2347 = vmul.f32 %v611, %v75
    %v2348 = vmul.f32 %v618, %v44
    %v2349 = vmul.f32 %v622, %v45
    %v2350 = vmul.f32 %v626, %v46
    %v2351 = vmul.f32 %v630, %v47
    %v2352 = vmul.f32 %v634, %v48
    %v2353 = vmul.f32 %v638, %v49
    %v2354 = vmul.f32 %v642, %v50
    %v2355 = vmul.f32 %v646, %v51
    %v2356 = vmul.f32 %v650, %v52
    %v2357 = vmul.f32 %v654, %v53
    %v2358 = vmul.f32 %v658, %v54
    %v2359 = vmul.f32 %v662, %v55
    %v2360 = vmul.f32 %v666, %v56
    %v2361 = vmul.f32 %v670, %v57
    %v2362 = vmul.f32 %v674, %v58
    %v2363 = vmul.f32 %v678, %v59
    %v2364 = vmul.f32 %v685, %v60
    %v2365 = vmul.f32 %v689, %v61
    %v2366 = vmul.f32 %v693, %v62
    %v2367 = vmul.f32 %v697, %v63
    %v2368 = vmul.f32 %v701, %v64
    %v2369 = vmul.f32 %v705, %v65
    %v2370 = vmul.f32 %v709, %v66
    %v2371 = vmul.f32 %v713, %v67
    %v2372 = vmul.f32 %v717, %v68
    %v2373 = vmul.f32 %v721, %v69
    %v2374 = vmul.f32 %v725, %v70
    %v2375 = vmul.f32 %v729, %v71
    %v2376 = vmul.f32 %v733, %v72
    %v2377 = vmul.f32 %v737, %v73
    %v2378 = vmul.f32 %v741, %v74
    %v2379 = vmul.f32 %v745, %v75
    %v2380 = vmul.f32 %v752, %v44
    %v2381 = vmul.f32 %v756, %v45
    %v2382 = vmul.f32 %v760, %v46
    %v2383 = vmul.f32 %v764, %v47
    %v2384 = vmul.f32 %v768, %v48
    %v2385 = vmul.f32 %v772, %v49
    %v2386 = vmul.f32 %v776, %v50
    %v2387 = vmul.f32 %v780, %v51
    %v2388 = vmul.f32 %v784, %v52
    %v2389 = vmul.f32 %v788, %v53
    %v2390 = vmul.f32 %v792, %v54
    %v2391 = vmul.f32 %v796, %v55
    %v2392 = vmul.f32 %v800, %v56
    %v2393 = vmul.f32 %v804, %v57
    %v2394 = vmul.f32 %v808, %v58
    %v2395 = vmul.f32 %v812, %v59
    %v2396 = vmul.f32 %v819, %v60
    %v2397 = vmul.f32 %v823, %v61
    %v2398 = vmul.f32 %v827, %v62
    %v2399 = vmul.f32 %v831, %v63
    %v2400 = vmul.f32 %v835, %v64
    %v2401 = vmul.f32 %v839, %v65
    %v2402 = vmul.f32 %v843, %v66
    %v2403 = vmul.f32 %v847, %v67
    %v2404 = vmul.f32 %v851, %v68
    %v2405 = vmul.f32 %v855, %v69
    %v2406 = vmul.f32 %v859, %v70
    %v2407 = vmul.f32 %v863, %v71
    %v2408 = vmul.f32 %v867, %v72
    %v2409 = vmul.f32 %v871, %v73
    %v2410 = vmul.f32 %v875, %v74
    %v2411 = vmul.f32 %v879, %v75
    %v2412 = vmul.f32 %v886, %v44
    %v2413 = vmul.f32 %v890, %v45
    %v2414 = vmul.f32 %v894, %v46
    %v2415 = vmul.f32 %v898, %v47
    %v2416 = vmul.f32 %v902, %v48
    %v2417 = vmul.f32 %v906, %v49
    %v2418 = vmul.f32 %v910, %v50
    %v2419 = vmul.f32 %v914, %v51
    %v2420 = vmul.f32 %v918, %v52
    %v2421 = vmul.f32 %v922, %v53
    %v2422 = vmul.f32 %v926, %v54
    %v2423 = vmul.f32 %v930, %v55
    %v2424 = vmul.f32 %v934, %v56
    %v2425 = vmul.f32 %v938, %v57
    %v2426 = vmul.f32 %v942, %v58
    %v2427 = vmul.f32 %v946, %v59
    %v2428 = vmul.f32 %v953, %v60
    %v2429 = vmul.f32 %v957, %v61
    %v2430 = vmul.f32 %v961, %v62
    %v2431 = vmul.f32 %v965, %v63
    %v2432 = vmul.f32 %v969, %v64
    %v2433 = vmul.f32 %v973, %v65
    %v2434 = vmul.f32 %v977, %v66
    %v2435 = vmul.f32 %v981, %v67
    %v2436 = vmul.f32 %v985, %v68
    %v2437 = vmul.f32 %v989, %v69
    %v2438 = vmul.f32 %v993, %v70
    %v2439 = vmul.f32 %v997, %v71
    %v2440 = vmul.f32 %v1001, %v72
    %v2441 = vmul.f32 %v1005, %v73
    %v2442 = vmul.f32 %v1009, %v74
    %v2443 = vmul.f32 %v1013, %v75
    %v2444 = vmul.f32 %v1020, %v44
    %v2445 = vmul.f32 %v1024, %v45
    %v2446 = vmul.f32 %v1028, %v46
    %v2447 = vmul.f32 %v1032, %v47
    %v2448 = vmul.f32 %v1036, %v48
    %v2449 = vmul.f32 %v1040, %v49
    %v2450 = vmul.f32 %v1044, %v50
    %v2451 = vmul.f32 %v1048, %v51
    %v2452 = vmul.f32 %v1052, %v52
    %v2453 = vmul.f32 %v1056, %v53
    %v2454 = vmul.f32 %v1060, %v54
    %v2455 = vmul.f32 %v1064, %v55
    %v2456 = vmul.f32 %v1068, %v56
    %v2457 = vmul.f32 %v1072, %v57
    %v2458 = vmul.f32 %v1076, %v58
    %v2459 = vmul.f32 %v1080, %v59
    %v2460 = vmul.f32 %v1087, %v60
    %v2461 = vmul.f32 %v1091, %v61
    %v2462 = vmul.f32 %v1095, %v62
    %v2463 = vmul.f32 %v1099, %v63
    %v2464 = vmul.f32 %v1103, %v64
    %v2465 = vmul.f32 %v1107, %v65
    %v2466 = vmul.f32 %v1111, %v66
    %v2467 = vmul.f32 %v1115, %v67
    %v2468 = vmul.f32 %v1119, %v68
    %v2469 = vmul.f32 %v1123, %v69
    %v2470 = vmul.f32 %v1127, %v70
    %v2471 = vmul.f32 %v1131, %v71
    %v2472 = vmul.f32 %v1135, %v72
    %v2473 = vmul.f32 %v1139, %v73
    %v2474 = vmul.f32 %v1143, %v74
    %v2475 = vmul.f32 %v1147, %v75
    %v2476 = vmul.f32 %v1154, %v44
    %v2477 = vmul.f32 %v1158, %v45
    %v2478 = vmul.f32 %v1162, %v46
    %v2479 = vmul.f32 %v1166, %v47
    %v2480 = vmul.f32 %v1170, %v48
    %v2481 = vmul.f32 %v1174, %v49
    %v2482 = vmul.f32 %v1178, %v50
    %v2483 = vmul.f32 %v1182, %v51
    %v2484 = vmul.f32 %v1186, %v52
    %v2485 = vmul.f32 %v1190, %v53
    %v2486 = vmul.f32 %v1194, %v54
    %v2487 = vmul.f32 %v1198, %v55
    %v2488 = vmul.f32 %v1202, %v56
    %v2489 = vmul.f32 %v1206, %v57
    %v2490 = vmul.f32 %v1210, %v58
    %v2491 = vmul.f32 %v1214, %v59
    %v2492 = vmul.f32 %v1221, %v60
    %v2493 = vmul.f32 %v1225, %v61
    %v2494 = vmul.f32 %v1229, %v62
    %v2495 = vmul.f32 %v1233, %v63
    %v2496 = vmul.f32 %v1237, %v64
    %v2497 = vmul.f32 %v1241, %v65
    %v2498 = vmul.f32 %v1245, %v66
    %v2499 = vmul.f32 %v1249, %v67
    %v2500 = vmul.f32 %v1253, %v68
    %v2501 = vmul.f32 %v1257, %v69
    %v2502 = vmul.f32 %v1261, %v70
    %v2503 = vmul.f32 %v1265, %v71
    %v2504 = vmul.f32 %v1269, %v72
    %v2505 = vmul.f32 %v1273, %v73
    %v2506 = vmul.f32 %v1277, %v74
    %v2507 = vmul.f32 %v1281, %v75
    %v2508 = vmul.f32 %v1288, %v44
    %v2509 = vmul.f32 %v1292, %v45
    %v2510 = vmul.f32 %v1296, %v46
    %v2511 = vmul.f32 %v1300, %v47
    %v2512 = vmul.f32 %v1304, %v48
    %v2513 = vmul.f32 %v1308, %v49
    %v2514 = vmul.f32 %v1312, %v50
    %v2515 = vmul.f32 %v1316, %v51
    %v2516 = vmul.f32 %v1320, %v52
    %v2517 = vmul.f32 %v1324, %v53
    %v2518 = vmul.f32 %v1328, %v54
    %v2519 = vmul.f32 %v1332, %v55
    %v2520 = vmul.f32 %v1336, %v56
    %v2521 = vmul.f32 %v1340, %v57
    %v2522 = vmul.f32 %v1344, %v58
    %v2523 = vmul.f32 %v1348, %v59
    %v2524 = vmul.f32 %v1355, %v60
    %v2525 = vmul.f32 %v1359, %v61
    %v2526 = vmul.f32 %v1363, %v62
    %v2527 = vmul.f32 %v1367, %v63
    %v2528 = vmul.f32 %v1371, %v64
    %v2529 = vmul.f32 %v1375, %v65
    %v2530 = vmul.f32 %v1379, %v66
    %v2531 = vmul.f32 %v1383, %v67
    %v2532 = vmul.f32 %v1387, %v68
    %v2533 = vmul.f32 %v1391, %v69
    %v2534 = vmul.f32 %v1395, %v70
    %v2535 = vmul.f32 %v1399, %v71
    %v2536 = vmul.f32 %v1403, %v72
    %v2537 = vmul.f32 %v1407, %v73
    %v2538 = vmul.f32 %v1411, %v74
    %v2539 = vmul.f32 %v1415, %v75
    %v2540 = vmul.f32 %v1422, %v44
    %v2541 = vmul.f32 %v1426, %v45
    %v2542 = vmul.f32 %v1430, %v46
    %v2543 = vmul.f32 %v1434, %v47
    %v2544 = vmul.f32 %v1438, %v48
    %v2545 = vmul.f32 %v1442, %v49
    %v2546 = vmul.f32 %v1446, %v50
    %v2547 = vmul.f32 %v1450, %v51
    %v2548 = vmul.f32 %v1454, %v52
    %v2549 = vmul.f32 %v1458, %v53
    %v2550 = vmul.f32 %v1462, %v54
    %v2551 = vmul.f32 %v1466, %v55
    %v2552 = vmul.f32 %v1470, %v56
    %v2553 = vmul.f32 %v1474, %v57
    %v2554 = vmul.f32 %v1478, %v58
    %v2555 = vmul.f32 %v1482, %v59
    %v2556 = vmul.f32 %v1489, %v60
    %v2557 = vmul.f32 %v1493, %v61
    %v2558 = vmul.f32 %v1497, %v62
    %v2559 = vmul.f32 %v1501, %v63
    %v2560 = vmul.f32 %v1505, %v64
    %v2561 = vmul.f32 %v1509, %v65
    %v2562 = vmul.f32 %v1513, %v66
    %v2563 = vmul.f32 %v1517, %v67
    %v2564 = vmul.f32 %v1521, %v68
    %v2565 = vmul.f32 %v1525, %v69
    %v2566 = vmul.f32 %v1529, %v70
    %v2567 = vmul.f32 %v1533, %v71
    %v2568 = vmul.f32 %v1537, %v72
    %v2569 = vmul.f32 %v1541, %v73
    %v2570 = vmul.f32 %v1545, %v74
    %v2571 = vmul.f32 %v1549, %v75
    %v2572 = vmul.f32 %v1556, %v44
    %v2573 = vmul.f32 %v1560, %v45
    %v2574 = vmul.f32 %v1564, %v46
    %v2575 = vmul.f32 %v1568, %v47
    %v2576 = vmul.f32 %v1572, %v48
    %v2577 = vmul.f32 %v1576, %v49
    %v2578 = vmul.f32 %v1580, %v50
    %v2579 = vmul.f32 %v1584, %v51
    %v2580 = vmul.f32 %v1588, %v52
    %v2581 = vmul.f32 %v1592, %v53
    %v2582 = vmul.f32 %v1596, %v54
    %v2583 = vmul.f32 %v1600, %v55
    %v2584 = vmul.f32 %v1604, %v56
    %v2585 = vmul.f32 %v1608, %v57
    %v2586 = vmul.f32 %v1612, %v58
    %v2587 = vmul.f32 %v1616, %v59
    %v2588 = vmul.f32 %v1623, %v60
    %v2589 = vmul.f32 %v1627, %v61
    %v2590 = vmul.f32 %v1631, %v62
    %v2591 = vmul.f32 %v1635, %v63
    %v2592 = vmul.f32 %v1639, %v64
    %v2593 = vmul.f32 %v1643, %v65
    %v2594 = vmul.f32 %v1647, %v66
    %v2595 = vmul.f32 %v1651, %v67
    %v2596 = vmul.f32 %v1655, %v68
    %v2597 = vmul.f32 %v1659, %v69
    %v2598 = vmul.f32 %v1663, %v70
    %v2599 = vmul.f32 %v1667, %v71
    %v2600 = vmul.f32 %v1671, %v72
    %v2601 = vmul.f32 %v1675, %v73
    %v2602 = vmul.f32 %v1679, %v74
    %v2603 = vmul.f32 %v1683, %v75
    %v2604 = vmul.f32 %v1690, %v44
    %v2605 = vmul.f32 %v1694, %v45
    %v2606 = vmul.f32 %v1698, %v46
    %v2607 = vmul.f32 %v1702, %v47
    %v2608 = vmul.f32 %v1706, %v48
    %v2609 = vmul.f32 %v1710, %v49
    %v2610 = vmul.f32 %v1714, %v50
    %v2611 = vmul.f32 %v1718, %v51
    %v2612 = vmul.f32 %v1722, %v52
    %v2613 = vmul.f32 %v1726, %v53
    %v2614 = vmul.f32 %v1730, %v54
    %v2615 = vmul.f32 %v1734, %v55
    %v2616 = vmul.f32 %v1738, %v56
    %v2617 = vmul.f32 %v1742, %v57
    %v2618 = vmul.f32 %v1746, %v58
    %v2619 = vmul.f32 %v1750, %v59
    %v2620 = vmul.f32 %v1757, %v60
    %v2621 = vmul.f32 %v1761, %v61
    %v2622 = vmul.f32 %v1765, %v62
    %v2623 = vmul.f32 %v1769, %v63
    %v2624 = vmul.f32 %v1773, %v64
    %v2625 = vmul.f32 %v1777, %v65
    %v2626 = vmul.f32 %v1781, %v66
    %v2627 = vmul.f32 %v1785, %v67
    %v2628 = vmul.f32 %v1789, %v68
    %v2629 = vmul.f32 %v1793, %v69
    %v2630 = vmul.f32 %v1797, %v70
    %v2631 = vmul.f32 %v1801, %v71
    %v2632 = vmul.f32 %v1805, %v72
    %v2633 = vmul.f32 %v1809, %v73
    %v2634 = vmul.f32 %v1813, %v74
    %v2635 = vmul.f32 %v1817, %v75
    %v2636 = vmul.f32 %v1824, %v44
    %v2637 = vmul.f32 %v1828, %v45
    %v2638 = vmul.f32 %v1832, %v46
    %v2639 = vmul.f32 %v1836, %v47
    %v2640 = vmul.f32 %v1840, %v48
    %v2641 = vmul.f32 %v1844, %v49
    %v2642 = vmul.f32 %v1848, %v50
    %v2643 = vmul.f32 %v1852, %v51
    %v2644 = vmul.f32 %v1856, %v52
    %v2645 = vmul.f32 %v1860, %v53
    %v2646 = vmul.f32 %v1864, %v54
    %v2647 = vmul.f32 %v1868, %v55
    %v2648 = vmul.f32 %v1872, %v56
    %v2649 = vmul.f32 %v1876, %v57
    %v2650 = vmul.f32 %v1880, %v58
    %v2651 = vmul.f32 %v1884, %v59
    %v2652 = vmul.f32 %v1891, %v60
    %v2653 = vmul.f32 %v1895, %v61
    %v2654 = vmul.f32 %v1899, %v62
    %v2655 = vmul.f32 %v1903, %v63
    %v2656 = vmul.f32 %v1907, %v64
    %v2657 = vmul.f32 %v1911, %v65
    %v2658 = vmul.f32 %v1915, %v66
    %v2659 = vmul.f32 %v1919, %v67
    %v2660 = vmul.f32 %v1923, %v68
    %v2661 = vmul.f32 %v1927, %v69
    %v2662 = vmul.f32 %v1931, %v70
    %v2663 = vmul.f32 %v1935, %v71
    %v2664 = vmul.f32 %v1939, %v72
    %v2665 = vmul.f32 %v1943, %v73
    %v2666 = vmul.f32 %v1947, %v74
    %v2667 = vmul.f32 %v1951, %v75
    %v2668 = vmul.f32 %v1958, %v44
    %v2669 = vmul.f32 %v1962, %v45
    %v2670 = vmul.f32 %v1966, %v46
    %v2671 = vmul.f32 %v1970, %v47
    %v2672 = vmul.f32 %v1974, %v48
    %v2673 = vmul.f32 %v1978, %v49
    %v2674 = vmul.f32 %v1982, %v50
    %v2675 = vmul.f32 %v1986, %v51
    %v2676 = vmul.f32 %v1990, %v52
    %v2677 = vmul.f32 %v1994, %v53
    %v2678 = vmul.f32 %v1998, %v54
    %v2679 = vmul.f32 %v2002, %v55
    %v2680 = vmul.f32 %v2006, %v56
    %v2681 = vmul.f32 %v2010, %v57
    %v2682 = vmul.f32 %v2014, %v58
    %v2683 = vmul.f32 %v2018, %v59
    %v2684 = vmul.f32 %v2025, %v60
    %v2685 = vmul.f32 %v2029, %v61
    %v2686 = vmul.f32 %v2033, %v62
    %v2687 = vmul.f32 %v2037, %v63
    %v2688 = vmul.f32 %v2041, %v64
    %v2689 = vmul.f32 %v2045, %v65
    %v2690 = vmul.f32 %v2049, %v66
    %v2691 = vmul.f32 %v2053, %v67
    %v2692 = vmul.f32 %v2057, %v68
    %v2693 = vmul.f32 %v2061, %v69
    %v2694 = vmul.f32 %v2065, %v70
    %v2695 = vmul.f32 %v2069, %v71
    %v2696 = vmul.f32 %v2073, %v72
    %v2697 = vmul.f32 %v2077, %v73
    %v2698 = vmul.f32 %v2081, %v74
    %v2699 = vmul.f32 %v2085, %v75
    %v2700 = vmul.f32 %v2092, %v44
    %v2701 = vmul.f32 %v2096, %v45
    %v2702 = vmul.f32 %v2100, %v46
    %v2703 = vmul.f32 %v2104, %v47
    %v2704 = vmul.f32 %v2108, %v48
    %v2705 = vmul.f32 %v2112, %v49
    %v2706 = vmul.f32 %v2116, %v50
    %v2707 = vmul.f32 %v2120, %v51
    %v2708 = vmul.f32 %v2124, %v52
    %v2709 = vmul.f32 %v2128, %v53
    %v2710 = vmul.f32 %v2132, %v54
    %v2711 = vmul.f32 %v2136, %v55
    %v2712 = vmul.f32 %v2140, %v56
    %v2713 = vmul.f32 %v2144, %v57
    %v2714 = vmul.f32 %v2148, %v58
    %v2715 = vmul.f32 %v2152, %v59
    %v2716 = vmul.f32 %v2159, %v60
    %v2717 = vmul.f32 %v2163, %v61
    %v2718 = vmul.f32 %v2167, %v62
    %v2719 = vmul.f32 %v2171, %v63
    %v2720 = vmul.f32 %v2175, %v64
    %v2721 = vmul.f32 %v2179, %v65
    %v2722 = vmul.f32 %v2183, %v66
    %v2723 = vmul.f32 %v2187, %v67
    %v2724 = vmul.f32 %v2191, %v68
    %v2725 = vmul.f32 %v2195, %v69
    %v2726 = vmul.f32 %v2199, %v70
    %v2727 = vmul.f32 %v2203, %v71
    %v2728 = vmul.f32 %v2207, %v72
    %v2729 = vmul.f32 %v2211, %v73
    %v2730 = vmul.f32 %v2215, %v74
    %v2731 = vmul.f32 %v2219, %v75
    %2732 = vst [vmem:[#allocation7] sm:$0xff] %v2220
    %2733 = vst [vmem:[#allocation7 + $0x8] sm:$0xff] %v2221
    %2734 = vst [vmem:[#allocation7 + $0x10] sm:$0xff] %v2222
    %2735 = vst [vmem:[#allocation7 + $0x18] sm:$0xff] %v2223
    %2736 = vst [vmem:[#allocation7 + $0x20] sm:$0xff] %v2224
    %2737 = vst [vmem:[#allocation7 + $0x28] sm:$0xff] %v2225
    %2738 = vst [vmem:[#allocation7 + $0x30] sm:$0xff] %v2226
    %2739 = vst [vmem:[#allocation7 + $0x38] sm:$0xff] %v2227
    %2740 = vst [vmem:[#allocation7 + $0x40] sm:$0xff] %v2228
    %2741 = vst [vmem:[#allocation7 + $0x48] sm:$0xff] %v2229
    %2742 = vst [vmem:[#allocation7 + $0x50] sm:$0xff] %v2230
    %2743 = vst [vmem:[#allocation7 + $0x58] sm:$0xff] %v2231
    %2744 = vst [vmem:[#allocation7 + $0x60] sm:$0xff] %v2232
    %2745 = vst [vmem:[#allocation7 + $0x68] sm:$0xff] %v2233
    %2746 = vst [vmem:[#allocation7 + $0x70] sm:$0xff] %v2234
    %2747 = vst [vmem:[#allocation7 + $0x78] sm:$0xff] %v2235
    %2748 = vst [vmem:[#allocation7 + $0x80] sm:$0xff] %v2236
    %2749 = vst [vmem:[#allocation7 + $0x88] sm:$0xff] %v2237
    %2750 = vst [vmem:[#allocation7 + $0x90] sm:$0xff] %v2238
    %2751 = vst [vmem:[#allocation7 + $0x98] sm:$0xff] %v2239
    %2752 = vst [vmem:[#allocation7 + $0xa0] sm:$0xff] %v2240
    %2753 = vst [vmem:[#allocation7 + $0xa8] sm:$0xff] %v2241
    %2754 = vst [vmem:[#allocation7 + $0xb0] sm:$0xff] %v2242
    %2755 = vst [vmem:[#allocation7 + $0xb8] sm:$0xff] %v2243
    %2756 = vst [vmem:[#allocation7 + $0xc0] sm:$0xff] %v2244
    %2757 = vst [vmem:[#allocation7 + $0xc8] sm:$0xff] %v2245
    %2758 = vst [vmem:[#allocation7 + $0xd0] sm:$0xff] %v2246
    %2759 = vst [vmem:[#allocation7 + $0xd8] sm:$0xff] %v2247
    %2760 = vst [vmem:[#allocation7 + $0xe0] sm:$0xff] %v2248
    %2761 = vst [vmem:[#allocation7 + $0xe8] sm:$0xff] %v2249
    %2762 = vst [vmem:[#allocation7 + $0xf0] sm:$0xff] %v2250
    %2763 = vst [vmem:[#allocation7 + $0xf8] sm:$0xff] %v2251
    %2764 = vst [vmem:[#allocation7 + $0x100] sm:$0xff] %v2252
    %2765 = vst [vmem:[#allocation7 + $0x108] sm:$0xff] %v2253
    %2766 = vst [vmem:[#allocation7 + $0x110] sm:$0xff] %v2254
    %2767 = vst [vmem:[#allocation7 + $0x118] sm:$0xff] %v2255
    %2768 = vst [vmem:[#allocation7 + $0x120] sm:$0xff] %v2256
    %2769 = vst [vmem:[#allocation7 + $0x128] sm:$0xff] %v2257
    %2770 = vst [vmem:[#allocation7 + $0x130] sm:$0xff] %v2258
    %2771 = vst [vmem:[#allocation7 + $0x138] sm:$0xff] %v2259
    %2772 = vst [vmem:[#allocation7 + $0x140] sm:$0xff] %v2260
    %2773 = vst [vmem:[#allocation7 + $0x148] sm:$0xff] %v2261
    %2774 = vst [vmem:[#allocation7 + $0x150] sm:$0xff] %v2262
    %2775 = vst [vmem:[#allocation7 + $0x158] sm:$0xff] %v2263
    %2776 = vst [vmem:[#allocation7 + $0x160] sm:$0xff] %v2264
    %2777 = vst [vmem:[#allocation7 + $0x168] sm:$0xff] %v2265
    %2778 = vst [vmem:[#allocation7 + $0x170] sm:$0xff] %v2266
    %2779 = vst [vmem:[#allocation7 + $0x178] sm:$0xff] %v2267
    %2780 = vst [vmem:[#allocation7 + $0x180] sm:$0xff] %v2268
    %2781 = vst [vmem:[#allocation7 + $0x188] sm:$0xff] %v2269
    %2782 = vst [vmem:[#allocation7 + $0x190] sm:$0xff] %v2270
    %2783 = vst [vmem:[#allocation7 + $0x198] sm:$0xff] %v2271
    %2784 = vst [vmem:[#allocation7 + $0x1a0] sm:$0xff] %v2272
    %2785 = vst [vmem:[#allocation7 + $0x1a8] sm:$0xff] %v2273
    %2786 = vst [vmem:[#allocation7 + $0x1b0] sm:$0xff] %v2274
    %2787 = vst [vmem:[#allocation7 + $0x1b8] sm:$0xff] %v2275
    %2788 = vst [vmem:[#allocation7 + $0x1c0] sm:$0xff] %v2276
    %2789 = vst [vmem:[#allocation7 + $0x1c8] sm:$0xff] %v2277
    %2790 = vst [vmem:[#allocation7 + $0x1d0] sm:$0xff] %v2278
    %2791 = vst [vmem:[#allocation7 + $0x1d8] sm:$0xff] %v2279
    %2792 = vst [vmem:[#allocation7 + $0x1e0] sm:$0xff] %v2280
    %2793 = vst [vmem:[#allocation7 + $0x1e8] sm:$0xff] %v2281
    %2794 = vst [vmem:[#allocation7 + $0x1f0] sm:$0xff] %v2282
    %2795 = vst [vmem:[#allocation7 + $0x1f8] sm:$0xff] %v2283
    %2796 = vst [vmem:[#allocation7 + $0x200] sm:$0xff] %v2284
    %2797 = vst [vmem:[#allocation7 + $0x208] sm:$0xff] %v2285
    %2798 = vst [vmem:[#allocation7 + $0x210] sm:$0xff] %v2286
    %2799 = vst [vmem:[#allocation7 + $0x218] sm:$0xff] %v2287
    %2800 = vst [vmem:[#allocation7 + $0x220] sm:$0xff] %v2288
    %2801 = vst [vmem:[#allocation7 + $0x228] sm:$0xff] %v2289
    %2802 = vst [vmem:[#allocation7 + $0x230] sm:$0xff] %v2290
    %2803 = vst [vmem:[#allocation7 + $0x238] sm:$0xff] %v2291
    %2804 = vst [vmem:[#allocation7 + $0x240] sm:$0xff] %v2292
    %2805 = vst [vmem:[#allocation7 + $0x248] sm:$0xff] %v2293
    %2806 = vst [vmem:[#allocation7 + $0x250] sm:$0xff] %v2294
    %2807 = vst [vmem:[#allocation7 + $0x258] sm:$0xff] %v2295
    %2808 = vst [vmem:[#allocation7 + $0x260] sm:$0xff] %v2296
    %2809 = vst [vmem:[#allocation7 + $0x268] sm:$0xff] %v2297
    %2810 = vst [vmem:[#allocation7 + $0x270] sm:$0xff] %v2298
    %2811 = vst [vmem:[#allocation7 + $0x278] sm:$0xff] %v2299
    %2812 = vst [vmem:[#allocation7 + $0x280] sm:$0xff] %v2300
    %2813 = vst [vmem:[#allocation7 + $0x288] sm:$0xff] %v2301
    %2814 = vst [vmem:[#allocation7 + $0x290] sm:$0xff] %v2302
    %2815 = vst [vmem:[#allocation7 + $0x298] sm:$0xff] %v2303
    %2816 = vst [vmem:[#allocation7 + $0x2a0] sm:$0xff] %v2304
    %2817 = vst [vmem:[#allocation7 + $0x2a8] sm:$0xff] %v2305
    %2818 = vst [vmem:[#allocation7 + $0x2b0] sm:$0xff] %v2306
    %2819 = vst [vmem:[#allocation7 + $0x2b8] sm:$0xff] %v2307
    %2820 = vst [vmem:[#allocation7 + $0x2c0] sm:$0xff] %v2308
    %2821 = vst [vmem:[#allocation7 + $0x2c8] sm:$0xff] %v2309
    %2822 = vst [vmem:[#allocation7 + $0x2d0] sm:$0xff] %v2310
    %2823 = vst [vmem:[#allocation7 + $0x2d8] sm:$0xff] %v2311
    %2824 = vst [vmem:[#allocation7 + $0x2e0] sm:$0xff] %v2312
    %2825 = vst [vmem:[#allocation7 + $0x2e8] sm:$0xff] %v2313
    %2826 = vst [vmem:[#allocation7 + $0x2f0] sm:$0xff] %v2314
    %2827 = vst [vmem:[#allocation7 + $0x2f8] sm:$0xff] %v2315
    %2828 = vst [vmem:[#allocation7 + $0x300] sm:$0xff] %v2316
    %2829 = vst [vmem:[#allocation7 + $0x308] sm:$0xff] %v2317
    %2830 = vst [vmem:[#allocation7 + $0x310] sm:$0xff] %v2318
    %2831 = vst [vmem:[#allocation7 + $0x318] sm:$0xff] %v2319
    %2832 = vst [vmem:[#allocation7 + $0x320] sm:$0xff] %v2320
    %2833 = vst [vmem:[#allocation7 + $0x328] sm:$0xff] %v2321
    %2834 = vst [vmem:[#allocation7 + $0x330] sm:$0xff] %v2322
    %2835 = vst [vmem:[#allocation7 + $0x338] sm:$0xff] %v2323
    %2836 = vst [vmem:[#allocation7 + $0x340] sm:$0xff] %v2324
    %2837 = vst [vmem:[#allocation7 + $0x348] sm:$0xff] %v2325
    %2838 = vst [vmem:[#allocation7 + $0x350] sm:$0xff] %v2326
    %2839 = vst [vmem:[#allocation7 + $0x358] sm:$0xff] %v2327
    %2840 = vst [vmem:[#allocation7 + $0x360] sm:$0xff] %v2328
    %2841 = vst [vmem:[#allocation7 + $0x368] sm:$0xff] %v2329
    %2842 = vst [vmem:[#allocation7 + $0x370] sm:$0xff] %v2330
    %2843 = vst [vmem:[#allocation7 + $0x378] sm:$0xff] %v2331
    %2844 = vst [vmem:[#allocation7 + $0x380] sm:$0xff] %v2332
    %2845 = vst [vmem:[#allocation7 + $0x388] sm:$0xff] %v2333
    %2846 = vst [vmem:[#allocation7 + $0x390] sm:$0xff] %v2334
    %2847 = vst [vmem:[#allocation7 + $0x398] sm:$0xff] %v2335
    %2848 = vst [vmem:[#allocation7 + $0x3a0] sm:$0xff] %v2336
    %2849 = vst [vmem:[#allocation7 + $0x3a8] sm:$0xff] %v2337
    %2850 = vst [vmem:[#allocation7 + $0x3b0] sm:$0xff] %v2338
    %2851 = vst [vmem:[#allocation7 + $0x3b8] sm:$0xff] %v2339
    %2852 = vst [vmem:[#allocation7 + $0x3c0] sm:$0xff] %v2340
    %2853 = vst [vmem:[#allocation7 + $0x3c8] sm:$0xff] %v2341
    %2854 = vst [vmem:[#allocation7 + $0x3d0] sm:$0xff] %v2342
    %2855 = vst [vmem:[#allocation7 + $0x3d8] sm:$0xff] %v2343
    %2856 = vst [vmem:[#allocation7 + $0x3e0] sm:$0xff] %v2344
    %2857 = vst [vmem:[#allocation7 + $0x3e8] sm:$0xff] %v2345
    %2858 = vst [vmem:[#allocation7 + $0x3f0] sm:$0xff] %v2346
    %2859 = vst [vmem:[#allocation7 + $0x3f8] sm:$0xff] %v2347
    %2860 = vst [vmem:[#allocation7 + $0x400] sm:$0xff] %v2348
    %2861 = vst [vmem:[#allocation7 + $0x408] sm:$0xff] %v2349
    %2862 = vst [vmem:[#allocation7 + $0x410] sm:$0xff] %v2350
    %2863 = vst [vmem:[#allocation7 + $0x418] sm:$0xff] %v2351
    %2864 = vst [vmem:[#allocation7 + $0x420] sm:$0xff] %v2352
    %2865 = vst [vmem:[#allocation7 + $0x428] sm:$0xff] %v2353
    %2866 = vst [vmem:[#allocation7 + $0x430] sm:$0xff] %v2354
    %2867 = vst [vmem:[#allocation7 + $0x438] sm:$0xff] %v2355
    %2868 = vst [vmem:[#allocation7 + $0x440] sm:$0xff] %v2356
    %2869 = vst [vmem:[#allocation7 + $0x448] sm:$0xff] %v2357
    %2870 = vst [vmem:[#allocation7 + $0x450] sm:$0xff] %v2358
    %2871 = vst [vmem:[#allocation7 + $0x458] sm:$0xff] %v2359
    %2872 = vst [vmem:[#allocation7 + $0x460] sm:$0xff] %v2360
    %2873 = vst [vmem:[#allocation7 + $0x468] sm:$0xff] %v2361
    %2874 = vst [vmem:[#allocation7 + $0x470] sm:$0xff] %v2362
    %2875 = vst [vmem:[#allocation7 + $0x478] sm:$0xff] %v2363
    %2876 = vst [vmem:[#allocation7 + $0x480] sm:$0xff] %v2364
    %2877 = vst [vmem:[#allocation7 + $0x488] sm:$0xff] %v2365
    %2878 = vst [vmem:[#allocation7 + $0x490] sm:$0xff] %v2366
    %2879 = vst [vmem:[#allocation7 + $0x498] sm:$0xff] %v2367
    %2880 = vst [vmem:[#allocation7 + $0x4a0] sm:$0xff] %v2368
    %2881 = vst [vmem:[#allocation7 + $0x4a8] sm:$0xff] %v2369
    %2882 = vst [vmem:[#allocation7 + $0x4b0] sm:$0xff] %v2370
    %2883 = vst [vmem:[#allocation7 + $0x4b8] sm:$0xff] %v2371
    %2884 = vst [vmem:[#allocation7 + $0x4c0] sm:$0xff] %v2372
    %2885 = vst [vmem:[#allocation7 + $0x4c8] sm:$0xff] %v2373
    %2886 = vst [vmem:[#allocation7 + $0x4d0] sm:$0xff] %v2374
    %2887 = vst [vmem:[#allocation7 + $0x4d8] sm:$0xff] %v2375
    %2888 = vst [vmem:[#allocation7 + $0x4e0] sm:$0xff] %v2376
    %2889 = vst [vmem:[#allocation7 + $0x4e8] sm:$0xff] %v2377
    %2890 = vst [vmem:[#allocation7 + $0x4f0] sm:$0xff] %v2378
    %2891 = vst [vmem:[#allocation7 + $0x4f8] sm:$0xff] %v2379
    %2892 = vst [vmem:[#allocation7 + $0x500] sm:$0xff] %v2380
    %2893 = vst [vmem:[#allocation7 + $0x508] sm:$0xff] %v2381
    %2894 = vst [vmem:[#allocation7 + $0x510] sm:$0xff] %v2382
    %2895 = vst [vmem:[#allocation7 + $0x518] sm:$0xff] %v2383
    %2896 = vst [vmem:[#allocation7 + $0x520] sm:$0xff] %v2384
    %2897 = vst [vmem:[#allocation7 + $0x528] sm:$0xff] %v2385
    %2898 = vst [vmem:[#allocation7 + $0x530] sm:$0xff] %v2386
    %2899 = vst [vmem:[#allocation7 + $0x538] sm:$0xff] %v2387
    %2900 = vst [vmem:[#allocation7 + $0x540] sm:$0xff] %v2388
    %2901 = vst [vmem:[#allocation7 + $0x548] sm:$0xff] %v2389
    %2902 = vst [vmem:[#allocation7 + $0x550] sm:$0xff] %v2390
    %2903 = vst [vmem:[#allocation7 + $0x558] sm:$0xff] %v2391
    %2904 = vst [vmem:[#allocation7 + $0x560] sm:$0xff] %v2392
    %2905 = vst [vmem:[#allocation7 + $0x568] sm:$0xff] %v2393
    %2906 = vst [vmem:[#allocation7 + $0x570] sm:$0xff] %v2394
    %2907 = vst [vmem:[#allocation7 + $0x578] sm:$0xff] %v2395
    %2908 = vst [vmem:[#allocation7 + $0x580] sm:$0xff] %v2396
    %2909 = vst [vmem:[#allocation7 + $0x588] sm:$0xff] %v2397
    %2910 = vst [vmem:[#allocation7 + $0x590] sm:$0xff] %v2398
    %2911 = vst [vmem:[#allocation7 + $0x598] sm:$0xff] %v2399
    %2912 = vst [vmem:[#allocation7 + $0x5a0] sm:$0xff] %v2400
    %2913 = vst [vmem:[#allocation7 + $0x5a8] sm:$0xff] %v2401
    %2914 = vst [vmem:[#allocation7 + $0x5b0] sm:$0xff] %v2402
    %2915 = vst [vmem:[#allocation7 + $0x5b8] sm:$0xff] %v2403
    %2916 = vst [vmem:[#allocation7 + $0x5c0] sm:$0xff] %v2404
    %2917 = vst [vmem:[#allocation7 + $0x5c8] sm:$0xff] %v2405
    %2918 = vst [vmem:[#allocation7 + $0x5d0] sm:$0xff] %v2406
    %2919 = vst [vmem:[#allocation7 + $0x5d8] sm:$0xff] %v2407
    %2920 = vst [vmem:[#allocation7 + $0x5e0] sm:$0xff] %v2408
    %2921 = vst [vmem:[#allocation7 + $0x5e8] sm:$0xff] %v2409
    %2922 = vst [vmem:[#allocation7 + $0x5f0] sm:$0xff] %v2410
    %2923 = vst [vmem:[#allocation7 + $0x5f8] sm:$0xff] %v2411
    %2924 = vst [vmem:[#allocation7 + $0x600] sm:$0xff] %v2412
    %2925 = vst [vmem:[#allocation7 + $0x608] sm:$0xff] %v2413
    %2926 = vst [vmem:[#allocation7 + $0x610] sm:$0xff] %v2414
    %2927 = vst [vmem:[#allocation7 + $0x618] sm:$0xff] %v2415
    %2928 = vst [vmem:[#allocation7 + $0x620] sm:$0xff] %v2416
    %2929 = vst [vmem:[#allocation7 + $0x628] sm:$0xff] %v2417
    %2930 = vst [vmem:[#allocation7 + $0x630] sm:$0xff] %v2418
    %2931 = vst [vmem:[#allocation7 + $0x638] sm:$0xff] %v2419
    %2932 = vst [vmem:[#allocation7 + $0x640] sm:$0xff] %v2420
    %2933 = vst [vmem:[#allocation7 + $0x648] sm:$0xff] %v2421
    %2934 = vst [vmem:[#allocation7 + $0x650] sm:$0xff] %v2422
    %2935 = vst [vmem:[#allocation7 + $0x658] sm:$0xff] %v2423
    %2936 = vst [vmem:[#allocation7 + $0x660] sm:$0xff] %v2424
    %2937 = vst [vmem:[#allocation7 + $0x668] sm:$0xff] %v2425
    %2938 = vst [vmem:[#allocation7 + $0x670] sm:$0xff] %v2426
    %2939 = vst [vmem:[#allocation7 + $0x678] sm:$0xff] %v2427
    %2940 = vst [vmem:[#allocation7 + $0x680] sm:$0xff] %v2428
    %2941 = vst [vmem:[#allocation7 + $0x688] sm:$0xff] %v2429
    %2942 = vst [vmem:[#allocation7 + $0x690] sm:$0xff] %v2430
    %2943 = vst [vmem:[#allocation7 + $0x698] sm:$0xff] %v2431
    %2944 = vst [vmem:[#allocation7 + $0x6a0] sm:$0xff] %v2432
    %2945 = vst [vmem:[#allocation7 + $0x6a8] sm:$0xff] %v2433
    %2946 = vst [vmem:[#allocation7 + $0x6b0] sm:$0xff] %v2434
    %2947 = vst [vmem:[#allocation7 + $0x6b8] sm:$0xff] %v2435
    %2948 = vst [vmem:[#allocation7 + $0x6c0] sm:$0xff] %v2436
    %2949 = vst [vmem:[#allocation7 + $0x6c8] sm:$0xff] %v2437
    %2950 = vst [vmem:[#allocation7 + $0x6d0] sm:$0xff] %v2438
    %2951 = vst [vmem:[#allocation7 + $0x6d8] sm:$0xff] %v2439
    %2952 = vst [vmem:[#allocation7 + $0x6e0] sm:$0xff] %v2440
    %2953 = vst [vmem:[#allocation7 + $0x6e8] sm:$0xff] %v2441
    %2954 = vst [vmem:[#allocation7 + $0x6f0] sm:$0xff] %v2442
    %2955 = vst [vmem:[#allocation7 + $0x6f8] sm:$0xff] %v2443
    %2956 = vst [vmem:[#allocation7 + $0x700] sm:$0xff] %v2444
    %2957 = vst [vmem:[#allocation7 + $0x708] sm:$0xff] %v2445
    %2958 = vst [vmem:[#allocation7 + $0x710] sm:$0xff] %v2446
    %2959 = vst [vmem:[#allocation7 + $0x718] sm:$0xff] %v2447
    %2960 = vst [vmem:[#allocation7 + $0x720] sm:$0xff] %v2448
    %2961 = vst [vmem:[#allocation7 + $0x728] sm:$0xff] %v2449
    %2962 = vst [vmem:[#allocation7 + $0x730] sm:$0xff] %v2450
    %2963 = vst [vmem:[#allocation7 + $0x738] sm:$0xff] %v2451
    %2964 = vst [vmem:[#allocation7 + $0x740] sm:$0xff] %v2452
    %2965 = vst [vmem:[#allocation7 + $0x748] sm:$0xff] %v2453
    %2966 = vst [vmem:[#allocation7 + $0x750] sm:$0xff] %v2454
    %2967 = vst [vmem:[#allocation7 + $0x758] sm:$0xff] %v2455
    %2968 = vst [vmem:[#allocation7 + $0x760] sm:$0xff] %v2456
    %2969 = vst [vmem:[#allocation7 + $0x768] sm:$0xff] %v2457
    %2970 = vst [vmem:[#allocation7 + $0x770] sm:$0xff] %v2458
    %2971 = vst [vmem:[#allocation7 + $0x778] sm:$0xff] %v2459
    %2972 = vst [vmem:[#allocation7 + $0x780] sm:$0xff] %v2460
    %2973 = vst [vmem:[#allocation7 + $0x788] sm:$0xff] %v2461
    %2974 = vst [vmem:[#allocation7 + $0x790] sm:$0xff] %v2462
    %2975 = vst [vmem:[#allocation7 + $0x798] sm:$0xff] %v2463
    %2976 = vst [vmem:[#allocation7 + $0x7a0] sm:$0xff] %v2464
    %2977 = vst [vmem:[#allocation7 + $0x7a8] sm:$0xff] %v2465
    %2978 = vst [vmem:[#allocation7 + $0x7b0] sm:$0xff] %v2466
    %2979 = vst [vmem:[#allocation7 + $0x7b8] sm:$0xff] %v2467
    %2980 = vst [vmem:[#allocation7 + $0x7c0] sm:$0xff] %v2468
    %2981 = vst [vmem:[#allocation7 + $0x7c8] sm:$0xff] %v2469
    %2982 = vst [vmem:[#allocation7 + $0x7d0] sm:$0xff] %v2470
    %2983 = vst [vmem:[#allocation7 + $0x7d8] sm:$0xff] %v2471
    %2984 = vst [vmem:[#allocation7 + $0x7e0] sm:$0xff] %v2472
    %2985 = vst [vmem:[#allocation7 + $0x7e8] sm:$0xff] %v2473
    %2986 = vst [vmem:[#allocation7 + $0x7f0] sm:$0xff] %v2474
    %2987 = vst [vmem:[#allocation7 + $0x7f8] sm:$0xff] %v2475
    %2988 = vst [vmem:[#allocation7 + $0x800] sm:$0xff] %v2476
    %2989 = vst [vmem:[#allocation7 + $0x808] sm:$0xff] %v2477
    %2990 = vst [vmem:[#allocation7 + $0x810] sm:$0xff] %v2478
    %2991 = vst [vmem:[#allocation7 + $0x818] sm:$0xff] %v2479
    %2992 = vst [vmem:[#allocation7 + $0x820] sm:$0xff] %v2480
    %2993 = vst [vmem:[#allocation7 + $0x828] sm:$0xff] %v2481
    %2994 = vst [vmem:[#allocation7 + $0x830] sm:$0xff] %v2482
    %2995 = vst [vmem:[#allocation7 + $0x838] sm:$0xff] %v2483
    %2996 = vst [vmem:[#allocation7 + $0x840] sm:$0xff] %v2484
    %2997 = vst [vmem:[#allocation7 + $0x848] sm:$0xff] %v2485
    %2998 = vst [vmem:[#allocation7 + $0x850] sm:$0xff] %v2486
    %2999 = vst [vmem:[#allocation7 + $0x858] sm:$0xff] %v2487
    %3000 = vst [vmem:[#allocation7 + $0x860] sm:$0xff] %v2488
    %3001 = vst [vmem:[#allocation7 + $0x868] sm:$0xff] %v2489
    %3002 = vst [vmem:[#allocation7 + $0x870] sm:$0xff] %v2490
    %3003 = vst [vmem:[#allocation7 + $0x878] sm:$0xff] %v2491
    %3004 = vst [vmem:[#allocation7 + $0x880] sm:$0xff] %v2492
    %3005 = vst [vmem:[#allocation7 + $0x888] sm:$0xff] %v2493
    %3006 = vst [vmem:[#allocation7 + $0x890] sm:$0xff] %v2494
    %3007 = vst [vmem:[#allocation7 + $0x898] sm:$0xff] %v2495
    %3008 = vst [vmem:[#allocation7 + $0x8a0] sm:$0xff] %v2496
    %3009 = vst [vmem:[#allocation7 + $0x8a8] sm:$0xff] %v2497
    %3010 = vst [vmem:[#allocation7 + $0x8b0] sm:$0xff] %v2498
    %3011 = vst [vmem:[#allocation7 + $0x8b8] sm:$0xff] %v2499
    %3012 = vst [vmem:[#allocation7 + $0x8c0] sm:$0xff] %v2500
    %3013 = vst [vmem:[#allocation7 + $0x8c8] sm:$0xff] %v2501
    %3014 = vst [vmem:[#allocation7 + $0x8d0] sm:$0xff] %v2502
    %3015 = vst [vmem:[#allocation7 + $0x8d8] sm:$0xff] %v2503
    %3016 = vst [vmem:[#allocation7 + $0x8e0] sm:$0xff] %v2504
    %3017 = vst [vmem:[#allocation7 + $0x8e8] sm:$0xff] %v2505
    %3018 = vst [vmem:[#allocation7 + $0x8f0] sm:$0xff] %v2506
    %3019 = vst [vmem:[#allocation7 + $0x8f8] sm:$0xff] %v2507
    %3020 = vst [vmem:[#allocation7 + $0x900] sm:$0xff] %v2508
    %3021 = vst [vmem:[#allocation7 + $0x908] sm:$0xff] %v2509
    %3022 = vst [vmem:[#allocation7 + $0x910] sm:$0xff] %v2510
    %3023 = vst [vmem:[#allocation7 + $0x918] sm:$0xff] %v2511
    %3024 = vst [vmem:[#allocation7 + $0x920] sm:$0xff] %v2512
    %3025 = vst [vmem:[#allocation7 + $0x928] sm:$0xff] %v2513
    %3026 = vst [vmem:[#allocation7 + $0x930] sm:$0xff] %v2514
    %3027 = vst [vmem:[#allocation7 + $0x938] sm:$0xff] %v2515
    %3028 = vst [vmem:[#allocation7 + $0x940] sm:$0xff] %v2516
    %3029 = vst [vmem:[#allocation7 + $0x948] sm:$0xff] %v2517
    %3030 = vst [vmem:[#allocation7 + $0x950] sm:$0xff] %v2518
    %3031 = vst [vmem:[#allocation7 + $0x958] sm:$0xff] %v2519
    %3032 = vst [vmem:[#allocation7 + $0x960] sm:$0xff] %v2520
    %3033 = vst [vmem:[#allocation7 + $0x968] sm:$0xff] %v2521
    %3034 = vst [vmem:[#allocation7 + $0x970] sm:$0xff] %v2522
    %3035 = vst [vmem:[#allocation7 + $0x978] sm:$0xff] %v2523
    %3036 = vst [vmem:[#allocation7 + $0x980] sm:$0xff] %v2524
    %3037 = vst [vmem:[#allocation7 + $0x988] sm:$0xff] %v2525
    %3038 = vst [vmem:[#allocation7 + $0x990] sm:$0xff] %v2526
    %3039 = vst [vmem:[#allocation7 + $0x998] sm:$0xff] %v2527
    %3040 = vst [vmem:[#allocation7 + $0x9a0] sm:$0xff] %v2528
    %3041 = vst [vmem:[#allocation7 + $0x9a8] sm:$0xff] %v2529
    %3042 = vst [vmem:[#allocation7 + $0x9b0] sm:$0xff] %v2530
    %3043 = vst [vmem:[#allocation7 + $0x9b8] sm:$0xff] %v2531
    %3044 = vst [vmem:[#allocation7 + $0x9c0] sm:$0xff] %v2532
    %3045 = vst [vmem:[#allocation7 + $0x9c8] sm:$0xff] %v2533
    %3046 = vst [vmem:[#allocation7 + $0x9d0] sm:$0xff] %v2534
    %3047 = vst [vmem:[#allocation7 + $0x9d8] sm:$0xff] %v2535
    %3048 = vst [vmem:[#allocation7 + $0x9e0] sm:$0xff] %v2536
    %3049 = vst [vmem:[#allocation7 + $0x9e8] sm:$0xff] %v2537
    %3050 = vst [vmem:[#allocation7 + $0x9f0] sm:$0xff] %v2538
    %3051 = vst [vmem:[#allocation7 + $0x9f8] sm:$0xff] %v2539
    %3052 = vst [vmem:[#allocation7 + $0xa00] sm:$0xff] %v2540
    %3053 = vst [vmem:[#allocation7 + $0xa08] sm:$0xff] %v2541
    %3054 = vst [vmem:[#allocation7 + $0xa10] sm:$0xff] %v2542
    %3055 = vst [vmem:[#allocation7 + $0xa18] sm:$0xff] %v2543
    %3056 = vst [vmem:[#allocation7 + $0xa20] sm:$0xff] %v2544
    %3057 = vst [vmem:[#allocation7 + $0xa28] sm:$0xff] %v2545
    %3058 = vst [vmem:[#allocation7 + $0xa30] sm:$0xff] %v2546
    %3059 = vst [vmem:[#allocation7 + $0xa38] sm:$0xff] %v2547
    %3060 = vst [vmem:[#allocation7 + $0xa40] sm:$0xff] %v2548
    %3061 = vst [vmem:[#allocation7 + $0xa48] sm:$0xff] %v2549
    %3062 = vst [vmem:[#allocation7 + $0xa50] sm:$0xff] %v2550
    %3063 = vst [vmem:[#allocation7 + $0xa58] sm:$0xff] %v2551
    %3064 = vst [vmem:[#allocation7 + $0xa60] sm:$0xff] %v2552
    %3065 = vst [vmem:[#allocation7 + $0xa68] sm:$0xff] %v2553
    %3066 = vst [vmem:[#allocation7 + $0xa70] sm:$0xff] %v2554
    %3067 = vst [vmem:[#allocation7 + $0xa78] sm:$0xff] %v2555
    %3068 = vst [vmem:[#allocation7 + $0xa80] sm:$0xff] %v2556
    %3069 = vst [vmem:[#allocation7 + $0xa88] sm:$0xff] %v2557
    %3070 = vst [vmem:[#allocation7 + $0xa90] sm:$0xff] %v2558
    %3071 = vst [vmem:[#allocation7 + $0xa98] sm:$0xff] %v2559
    %3072 = vst [vmem:[#allocation7 + $0xaa0] sm:$0xff] %v2560
    %3073 = vst [vmem:[#allocation7 + $0xaa8] sm:$0xff] %v2561
    %3074 = vst [vmem:[#allocation7 + $0xab0] sm:$0xff] %v2562
    %3075 = vst [vmem:[#allocation7 + $0xab8] sm:$0xff] %v2563
    %3076 = vst [vmem:[#allocation7 + $0xac0] sm:$0xff] %v2564
    %3077 = vst [vmem:[#allocation7 + $0xac8] sm:$0xff] %v2565
    %3078 = vst [vmem:[#allocation7 + $0xad0] sm:$0xff] %v2566
    %3079 = vst [vmem:[#allocation7 + $0xad8] sm:$0xff] %v2567
    %3080 = vst [vmem:[#allocation7 + $0xae0] sm:$0xff] %v2568
    %3081 = vst [vmem:[#allocation7 + $0xae8] sm:$0xff] %v2569
    %3082 = vst [vmem:[#allocation7 + $0xaf0] sm:$0xff] %v2570
    %3083 = vst [vmem:[#allocation7 + $0xaf8] sm:$0xff] %v2571
    %3084 = vst [vmem:[#allocation7 + $0xb00] sm:$0xff] %v2572
    %3085 = vst [vmem:[#allocation7 + $0xb08] sm:$0xff] %v2573
    %3086 = vst [vmem:[#allocation7 + $0xb10] sm:$0xff] %v2574
    %3087 = vst [vmem:[#allocation7 + $0xb18] sm:$0xff] %v2575
    %3088 = vst [vmem:[#allocation7 + $0xb20] sm:$0xff] %v2576
    %3089 = vst [vmem:[#allocation7 + $0xb28] sm:$0xff] %v2577
    %3090 = vst [vmem:[#allocation7 + $0xb30] sm:$0xff] %v2578
    %3091 = vst [vmem:[#allocation7 + $0xb38] sm:$0xff] %v2579
    %3092 = vst [vmem:[#allocation7 + $0xb40] sm:$0xff] %v2580
    %3093 = vst [vmem:[#allocation7 + $0xb48] sm:$0xff] %v2581
    %3094 = vst [vmem:[#allocation7 + $0xb50] sm:$0xff] %v2582
    %3095 = vst [vmem:[#allocation7 + $0xb58] sm:$0xff] %v2583
    %3096 = vst [vmem:[#allocation7 + $0xb60] sm:$0xff] %v2584
    %3097 = vst [vmem:[#allocation7 + $0xb68] sm:$0xff] %v2585
    %3098 = vst [vmem:[#allocation7 + $0xb70] sm:$0xff] %v2586
    %3099 = vst [vmem:[#allocation7 + $0xb78] sm:$0xff] %v2587
    %3100 = vst [vmem:[#allocation7 + $0xb80] sm:$0xff] %v2588
    %3101 = vst [vmem:[#allocation7 + $0xb88] sm:$0xff] %v2589
    %3102 = vst [vmem:[#allocation7 + $0xb90] sm:$0xff] %v2590
    %3103 = vst [vmem:[#allocation7 + $0xb98] sm:$0xff] %v2591
    %3104 = vst [vmem:[#allocation7 + $0xba0] sm:$0xff] %v2592
    %3105 = vst [vmem:[#allocation7 + $0xba8] sm:$0xff] %v2593
    %3106 = vst [vmem:[#allocation7 + $0xbb0] sm:$0xff] %v2594
    %3107 = vst [vmem:[#allocation7 + $0xbb8] sm:$0xff] %v2595
    %3108 = vst [vmem:[#allocation7 + $0xbc0] sm:$0xff] %v2596
    %3109 = vst [vmem:[#allocation7 + $0xbc8] sm:$0xff] %v2597
    %3110 = vst [vmem:[#allocation7 + $0xbd0] sm:$0xff] %v2598
    %3111 = vst [vmem:[#allocation7 + $0xbd8] sm:$0xff] %v2599
    %3112 = vst [vmem:[#allocation7 + $0xbe0] sm:$0xff] %v2600
    %3113 = vst [vmem:[#allocation7 + $0xbe8] sm:$0xff] %v2601
    %3114 = vst [vmem:[#allocation7 + $0xbf0] sm:$0xff] %v2602
    %3115 = vst [vmem:[#allocation7 + $0xbf8] sm:$0xff] %v2603
    %3116 = vst [vmem:[#allocation7 + $0xc00] sm:$0xff] %v2604
    %3117 = vst [vmem:[#allocation7 + $0xc08] sm:$0xff] %v2605
    %3118 = vst [vmem:[#allocation7 + $0xc10] sm:$0xff] %v2606
    %3119 = vst [vmem:[#allocation7 + $0xc18] sm:$0xff] %v2607
    %3120 = vst [vmem:[#allocation7 + $0xc20] sm:$0xff] %v2608
    %3121 = vst [vmem:[#allocation7 + $0xc28] sm:$0xff] %v2609
    %3122 = vst [vmem:[#allocation7 + $0xc30] sm:$0xff] %v2610
    %3123 = vst [vmem:[#allocation7 + $0xc38] sm:$0xff] %v2611
    %3124 = vst [vmem:[#allocation7 + $0xc40] sm:$0xff] %v2612
    %3125 = vst [vmem:[#allocation7 + $0xc48] sm:$0xff] %v2613
    %3126 = vst [vmem:[#allocation7 + $0xc50] sm:$0xff] %v2614
    %3127 = vst [vmem:[#allocation7 + $0xc58] sm:$0xff] %v2615
    %3128 = vst [vmem:[#allocation7 + $0xc60] sm:$0xff] %v2616
    %3129 = vst [vmem:[#allocation7 + $0xc68] sm:$0xff] %v2617
    %3130 = vst [vmem:[#allocation7 + $0xc70] sm:$0xff] %v2618
    %3131 = vst [vmem:[#allocation7 + $0xc78] sm:$0xff] %v2619
    %3132 = vst [vmem:[#allocation7 + $0xc80] sm:$0xff] %v2620
    %3133 = vst [vmem:[#allocation7 + $0xc88] sm:$0xff] %v2621
    %3134 = vst [vmem:[#allocation7 + $0xc90] sm:$0xff] %v2622
    %3135 = vst [vmem:[#allocation7 + $0xc98] sm:$0xff] %v2623
    %3136 = vst [vmem:[#allocation7 + $0xca0] sm:$0xff] %v2624
    %3137 = vst [vmem:[#allocation7 + $0xca8] sm:$0xff] %v2625
    %3138 = vst [vmem:[#allocation7 + $0xcb0] sm:$0xff] %v2626
    %3139 = vst [vmem:[#allocation7 + $0xcb8] sm:$0xff] %v2627
    %3140 = vst [vmem:[#allocation7 + $0xcc0] sm:$0xff] %v2628
    %3141 = vst [vmem:[#allocation7 + $0xcc8] sm:$0xff] %v2629
    %3142 = vst [vmem:[#allocation7 + $0xcd0] sm:$0xff] %v2630
    %3143 = vst [vmem:[#allocation7 + $0xcd8] sm:$0xff] %v2631
    %3144 = vst [vmem:[#allocation7 + $0xce0] sm:$0xff] %v2632
    %3145 = vst [vmem:[#allocation7 + $0xce8] sm:$0xff] %v2633
    %3146 = vst [vmem:[#allocation7 + $0xcf0] sm:$0xff] %v2634
    %3147 = vst [vmem:[#allocation7 + $0xcf8] sm:$0xff] %v2635
    %3148 = vst [vmem:[#allocation7 + $0xd00] sm:$0xff] %v2636
    %3149 = vst [vmem:[#allocation7 + $0xd08] sm:$0xff] %v2637
    %3150 = vst [vmem:[#allocation7 + $0xd10] sm:$0xff] %v2638
    %3151 = vst [vmem:[#allocation7 + $0xd18] sm:$0xff] %v2639
    %3152 = vst [vmem:[#allocation7 + $0xd20] sm:$0xff] %v2640
    %3153 = vst [vmem:[#allocation7 + $0xd28] sm:$0xff] %v2641
    %3154 = vst [vmem:[#allocation7 + $0xd30] sm:$0xff] %v2642
    %3155 = vst [vmem:[#allocation7 + $0xd38] sm:$0xff] %v2643
    %3156 = vst [vmem:[#allocation7 + $0xd40] sm:$0xff] %v2644
    %3157 = vst [vmem:[#allocation7 + $0xd48] sm:$0xff] %v2645
    %3158 = vst [vmem:[#allocation7 + $0xd50] sm:$0xff] %v2646
    %3159 = vst [vmem:[#allocation7 + $0xd58] sm:$0xff] %v2647
    %3160 = vst [vmem:[#allocation7 + $0xd60] sm:$0xff] %v2648
    %3161 = vst [vmem:[#allocation7 + $0xd68] sm:$0xff] %v2649
    %3162 = vst [vmem:[#allocation7 + $0xd70] sm:$0xff] %v2650
    %3163 = vst [vmem:[#allocation7 + $0xd78] sm:$0xff] %v2651
    %3164 = vst [vmem:[#allocation7 + $0xd80] sm:$0xff] %v2652
    %3165 = vst [vmem:[#allocation7 + $0xd88] sm:$0xff] %v2653
    %3166 = vst [vmem:[#allocation7 + $0xd90] sm:$0xff] %v2654
    %3167 = vst [vmem:[#allocation7 + $0xd98] sm:$0xff] %v2655
    %3168 = vst [vmem:[#allocation7 + $0xda0] sm:$0xff] %v2656
    %3169 = vst [vmem:[#allocation7 + $0xda8] sm:$0xff] %v2657
    %3170 = vst [vmem:[#allocation7 + $0xdb0] sm:$0xff] %v2658
    %3171 = vst [vmem:[#allocation7 + $0xdb8] sm:$0xff] %v2659
    %3172 = vst [vmem:[#allocation7 + $0xdc0] sm:$0xff] %v2660
    %3173 = vst [vmem:[#allocation7 + $0xdc8] sm:$0xff] %v2661
    %3174 = vst [vmem:[#allocation7 + $0xdd0] sm:$0xff] %v2662
    %3175 = vst [vmem:[#allocation7 + $0xdd8] sm:$0xff] %v2663
    %3176 = vst [vmem:[#allocation7 + $0xde0] sm:$0xff] %v2664
    %3177 = vst [vmem:[#allocation7 + $0xde8] sm:$0xff] %v2665
    %3178 = vst [vmem:[#allocation7 + $0xdf0] sm:$0xff] %v2666
    %3179 = vst [vmem:[#allocation7 + $0xdf8] sm:$0xff] %v2667
    %3180 = vst [vmem:[#allocation7 + $0xe00] sm:$0xff] %v2668
    %3181 = vst [vmem:[#allocation7 + $0xe08] sm:$0xff] %v2669
    %3182 = vst [vmem:[#allocation7 + $0xe10] sm:$0xff] %v2670
    %3183 = vst [vmem:[#allocation7 + $0xe18] sm:$0xff] %v2671
    %3184 = vst [vmem:[#allocation7 + $0xe20] sm:$0xff] %v2672
    %3185 = vst [vmem:[#allocation7 + $0xe28] sm:$0xff] %v2673
    %3186 = vst [vmem:[#allocation7 + $0xe30] sm:$0xff] %v2674
    %3187 = vst [vmem:[#allocation7 + $0xe38] sm:$0xff] %v2675
    %3188 = vst [vmem:[#allocation7 + $0xe40] sm:$0xff] %v2676
    %3189 = vst [vmem:[#allocation7 + $0xe48] sm:$0xff] %v2677
    %3190 = vst [vmem:[#allocation7 + $0xe50] sm:$0xff] %v2678
    %3191 = vst [vmem:[#allocation7 + $0xe58] sm:$0xff] %v2679
    %3192 = vst [vmem:[#allocation7 + $0xe60] sm:$0xff] %v2680
    %3193 = vst [vmem:[#allocation7 + $0xe68] sm:$0xff] %v2681
    %3194 = vst [vmem:[#allocation7 + $0xe70] sm:$0xff] %v2682
    %3195 = vst [vmem:[#allocation7 + $0xe78] sm:$0xff] %v2683
    %3196 = vst [vmem:[#allocation7 + $0xe80] sm:$0xff] %v2684
    %3197 = vst [vmem:[#allocation7 + $0xe88] sm:$0xff] %v2685
    %3198 = vst [vmem:[#allocation7 + $0xe90] sm:$0xff] %v2686
    %3199 = vst [vmem:[#allocation7 + $0xe98] sm:$0xff] %v2687
    %3200 = vst [vmem:[#allocation7 + $0xea0] sm:$0xff] %v2688
    %3201 = vst [vmem:[#allocation7 + $0xea8] sm:$0xff] %v2689
    %3202 = vst [vmem:[#allocation7 + $0xeb0] sm:$0xff] %v2690
    %3203 = vst [vmem:[#allocation7 + $0xeb8] sm:$0xff] %v2691
    %3204 = vst [vmem:[#allocation7 + $0xec0] sm:$0xff] %v2692
    %3205 = vst [vmem:[#allocation7 + $0xec8] sm:$0xff] %v2693
    %3206 = vst [vmem:[#allocation7 + $0xed0] sm:$0xff] %v2694
    %3207 = vst [vmem:[#allocation7 + $0xed8] sm:$0xff] %v2695
    %3208 = vst [vmem:[#allocation7 + $0xee0] sm:$0xff] %v2696
    %3209 = vst [vmem:[#allocation7 + $0xee8] sm:$0xff] %v2697
    %3210 = vst [vmem:[#allocation7 + $0xef0] sm:$0xff] %v2698
    %3211 = vst [vmem:[#allocation7 + $0xef8] sm:$0xff] %v2699
    %3212 = vst [vmem:[#allocation7 + $0xf00] sm:$0xff] %v2700
    %3213 = vst [vmem:[#allocation7 + $0xf08] sm:$0xff] %v2701
    %3214 = vst [vmem:[#allocation7 + $0xf10] sm:$0xff] %v2702
    %3215 = vst [vmem:[#allocation7 + $0xf18] sm:$0xff] %v2703
    %3216 = vst [vmem:[#allocation7 + $0xf20] sm:$0xff] %v2704
    %3217 = vst [vmem:[#allocation7 + $0xf28] sm:$0xff] %v2705
    %3218 = vst [vmem:[#allocation7 + $0xf30] sm:$0xff] %v2706
    %3219 = vst [vmem:[#allocation7 + $0xf38] sm:$0xff] %v2707
    %3220 = vst [vmem:[#allocation7 + $0xf40] sm:$0xff] %v2708
    %3221 = vst [vmem:[#allocation7 + $0xf48] sm:$0xff] %v2709
    %3222 = vst [vmem:[#allocation7 + $0xf50] sm:$0xff] %v2710
    %3223 = vst [vmem:[#allocation7 + $0xf58] sm:$0xff] %v2711
    %3224 = vst [vmem:[#allocation7 + $0xf60] sm:$0xff] %v2712
    %3225 = vst [vmem:[#allocation7 + $0xf68] sm:$0xff] %v2713
    %3226 = vst [vmem:[#allocation7 + $0xf70] sm:$0xff] %v2714
    %3227 = vst [vmem:[#allocation7 + $0xf78] sm:$0xff] %v2715
    %3228 = vst [vmem:[#allocation7 + $0xf80] sm:$0xff] %v2716
    %3229 = vst [vmem:[#allocation7 + $0xf88] sm:$0xff] %v2717
    %3230 = vst [vmem:[#allocation7 + $0xf90] sm:$0xff] %v2718
    %3231 = vst [vmem:[#allocation7 + $0xf98] sm:$0xff] %v2719
    %3232 = vst [vmem:[#allocation7 + $0xfa0] sm:$0xff] %v2720
    %3233 = vst [vmem:[#allocation7 + $0xfa8] sm:$0xff] %v2721
    %3234 = vst [vmem:[#allocation7 + $0xfb0] sm:$0xff] %v2722
    %3235 = vst [vmem:[#allocation7 + $0xfb8] sm:$0xff] %v2723
    %3236 = vst [vmem:[#allocation7 + $0xfc0] sm:$0xff] %v2724
    %3237 = vst [vmem:[#allocation7 + $0xfc8] sm:$0xff] %v2725
    %3238 = vst [vmem:[#allocation7 + $0xfd0] sm:$0xff] %v2726
    %3239 = vst [vmem:[#allocation7 + $0xfd8] sm:$0xff] %v2727
    %3240 = vst [vmem:[#allocation7 + $0xfe0] sm:$0xff] %v2728
    %3241 = vst [vmem:[#allocation7 + $0xfe8] sm:$0xff] %v2729
    %3242 = vst [vmem:[#allocation7 + $0xff0] sm:$0xff] %v2730
    %3243 = vst [vmem:[#allocation7 + $0xff8] sm:$0xff] %v2731
    // Predicated region
    $region18: #{tpu_custom_call.1} parent=1 // pred_check
      _
    $region19: #{tpu_custom_call.1} parent=1 // pred_check_branch
      %3245 = sbr.rel (0) target = $region21
    $region20: #{tpu_custom_call.1} parent=1 // pred_region
      %s3247 = ssub.s32 65536, 65536
      %3248 = vsyncadd [#allocation4], %s3247
      %s3249 = sshll.u32 [#allocation7], 4
      %s3250 = int_to_ptr.vmem [resolvable:$true] %s3249
      %3255 = dma.vmem_to_hbm [thread:$0]  %s3250, 65536, %s2, [#allocation4], 128, 128, 8
    $region21: #{tpu_custom_call.1} parent=1 // pred_fallthru
      _
    // Predicated region
    $region22: #{tpu_custom_call.1} parent=1 // pred_check
      _
    $region23: #{tpu_custom_call.1} parent=1 // pred_check_branch
      %3257 = sbr.rel (0) target = $region25
    $region24: #{tpu_custom_call.1} parent=1 // pred_region
      %3258 = dma.done [#allocation4], 65536
    $region25: #{tpu_custom_call.1} parent=1 // pred_fallthru
      _
    %3259 = vsyncpa [#allocation3], 1
    %3260 = vsyncpa [#allocation6], 1
    %3261 = vsyncpa [#allocation4], 1

</llo_original>
